<compile_context>
chip_gen: v5e
topology: v5e:2x2
jax: 0.10.0
libtpu: 0.0.40
codegen_flags: <defaults>
</compile_context>

<pallas_src>
import jax
import jax.numpy as jnp
from jax.experimental import pallas as pl
from jax.experimental.pallas import tpu as pltpu  # noqa: F401  (TPU backend)

# bfloat16 MXU operands (f32 accumulate). Use jnp.float32 for exact parity.
MXU_DTYPE = jnp.bfloat16


# ----------------------------------------------------------------------------
# Fused kernel: layer-0 x-projection prologue + 2-layer LSTM recurrence
#               + Linear(hidden, 1) on the last step.
# ----------------------------------------------------------------------------
def _fused_lstm_fc_kernel(x_ref, wih0_ref, b0_ref, whhblk_ref, wih1_ref,
                          b1_ref, fcw_ref, fcb_ref, o_ref):
    TB, _ = x_ref.shape
    H4 = b0_ref.shape[-1]
    H = H4 // 4
    B = o_ref.shape[0]
    T = TB // B
    mxu_dtype = whhblk_ref.dtype

    # -- Prologue: layer-0 input projection for ALL steps (off the recurrent
    #    critical path). One (T*B, F) @ (F, 4H) MXU pass, kept in f32.
    gx0 = (jnp.dot(x_ref[...], wih0_ref[...],
                   preferred_element_type=jnp.float32) + b0_ref[...])

    # Constant operands: load once, stay resident for the whole kernel.
    whh_blk = whhblk_ref[...]   # (2H, 8H) block-diag [[Whh0^T, 0], [0, Whh1^T]]
    wih1 = wih1_ref[...]        # (H, 4H) = W_ih_l1^T
    b1 = b1_ref[...]            # (1, 4H) fused layer-1 bias

    def cell(gates, c):
        # Full-slab sigmoid/tanh: 2 EUP pushes per cell instead of 4 narrow ones.
        sg = jax.nn.sigmoid(gates)
        th = jnp.tanh(gates)
        i_g = sg[:, 0 * H:1 * H]          # PyTorch gate order [i, f, g, o]
        f_g = sg[:, 1 * H:2 * H]
        g_g = th[:, 2 * H:3 * H]
        o_g = sg[:, 3 * H:4 * H]
        c_new = f_g * c + i_g * g_g
        h_new = o_g * jnp.tanh(c_new)
        return h_new, c_new

    z = jnp.zeros((B, H), jnp.float32)
    c0, c1, h1 = z, z, z
    hcat = jnp.zeros((B, 2 * H), jnp.float32)   # [h0 | h1] state slab

    # Static unroll over the short time axis; all carries stay in vregs.
    for t in range(T):
        # One block-diagonal MXU push covers both recurrent contributions:
        #   rec[:, :4H] = h0 @ Whh0^T      rec[:, 4H:] = h1 @ Whh1^T
        rec = jnp.dot(hcat.astype(mxu_dtype), whh_blk,
                      preferred_element_type=jnp.float32)          # (B, 8H)
        g0 = gx0[t * B:(t + 1) * B, :] + rec[:, :H4]
        h0, c0 = cell(g0, c0)
        # Layer-1 input is layer-0's fresh h: this dot cannot be hoisted.
        g1 = (jnp.dot(h0.astype(mxu_dtype), wih1,
                      preferred_element_type=jnp.float32)
              + rec[:, H4:] + b1)
        h1, c1 = cell(g1, c1)
        hcat = jnp.concatenate([h0, h1], axis=-1)

    # fc(output[-1, :]) — VPU multiply + lane reduction (no N=1 MXU matmul).
    o_ref[...] = (jnp.sum(h1 * fcw_ref[...], axis=-1, keepdims=True)
                  + fcb_ref[...])


# ----------------------------------------------------------------------------
# One-time (outside jit) weight packing: fused biases, transposed recurrent
# weights, block-diagonal [[Whh0^T, 0], [0, Whh1^T]], MXU dtype cast.
# ----------------------------------------------------------------------------
def pack_params(params, mxu_dtype=MXU_DTYPE):
    H4, _ = params["w_ih_l0"].shape
    H = H4 // 4
    whh0_t = params["w_hh_l0"].T.astype(jnp.float32)         # (H, 4H)
    whh1_t = params["w_hh_l1"].T.astype(jnp.float32)         # (H, 4H)
    zeros = jnp.zeros((H, H4), jnp.float32)
    whh_blk = jnp.concatenate(
        [jnp.concatenate([whh0_t, zeros], axis=1),
         jnp.concatenate([zeros, whh1_t], axis=1)], axis=0)   # (2H, 8H)
    return {
        "wih0_t": params["w_ih_l0"].T.astype(jnp.float32),    # (F, 4H), f32 prologue
        "b0": (params["b_ih_l0"] + params["b_hh_l0"]).reshape(1, H4).astype(jnp.float32),
        "whh_blk": whh_blk.astype(mxu_dtype),                 # (2H, 8H)
        "wih1_t": params["w_ih_l1"].T.astype(mxu_dtype),      # (H, 4H)
        "b1": (params["b_ih_l1"] + params["b_hh_l1"]).reshape(1, H4).astype(jnp.float32),
        "fcw": params["fc_w"].reshape(1, H).astype(jnp.float32),
        "fcb": params["fc_b"].reshape(1, 1).astype(jnp.float32),
    }


# ----------------------------------------------------------------------------
# Wrapper: single grid-less pallas_call (no per-call XLA weight ops).
# ----------------------------------------------------------------------------
def lstm_module_forward(X, packed):
    """X: (T, B, F) f32 -> (B, 1) f32. Matches fc(nn.LSTM(X)[0][-1, :])."""
    T, B, F = X.shape
    H4 = packed["b0"].shape[-1]
    H = H4 // 4
    x2 = X.reshape(T * B, F).astype(jnp.float32)   # free metadata reshape

    return pl.pallas_call(
        _fused_lstm_fc_kernel,
        out_shape=jax.ShapeDtypeStruct((B, 1), jnp.float32),
        in_specs=[
            pl.BlockSpec((T * B, F), lambda: (0, 0)),       # X rows, time-major
            pl.BlockSpec((F, H4), lambda: (0, 0)),          # W_ih_l0^T (f32)
            pl.BlockSpec((1, H4), lambda: (0, 0)),          # fused bias layer 0
            pl.BlockSpec((2 * H, 2 * H4), lambda: (0, 0)),  # block-diag recurrent W
            pl.BlockSpec((H, H4), lambda: (0, 0)),          # W_ih_l1^T
            pl.BlockSpec((1, H4), lambda: (0, 0)),          # fused bias layer 1
            pl.BlockSpec((1, H), lambda: (0, 0)),           # fc weight
            pl.BlockSpec((1, 1), lambda: (0, 0)),           # fc bias
        ],
        out_specs=pl.BlockSpec((B, 1), lambda: (0, 0)),
        # NOTE(v7x): to serve many independent sequences, add a leading grid
        # axis over them with dimension_semantics=("parallel",) so the work
        # shards across both TensorCores.
    )(x2, packed["wih0_t"], packed["b0"], packed["whh_blk"],
      packed["wih1_t"], packed["b1"], packed["fcw"], packed["fcb"])


# ----------------------------------------------------------------------------
# Pure-JAX reference (correctness check only)
# ----------------------------------------------------------------------------
def _ref_lstm_layer(x, w_ih, w_hh, b_ih, b_hh):
    T, B, _ = x.shape
    H = w_hh.shape[1]

    def step(carry, x_t):
        h, c = carry
        gates = x_t @ w_ih.T + h @ w_hh.T + b_ih + b_hh
        i_g = jax.nn.sigmoid(gates[:, 0 * H:1 * H])
        f_g = jax.nn.sigmoid(gates[:, 1 * H:2 * H])
        g_g = jnp.tanh(gates[:, 2 * H:3 * H])
        o_g = jax.nn.sigmoid(gates[:, 3 * H:4 * H])
        c = f_g * c + i_g * g_g
        h = o_g * jnp.tanh(c)
        return (h, c), h

    init = (jnp.zeros((B, H), jnp.float32), jnp.zeros((B, H), jnp.float32))
    _, hs = jax.lax.scan(step, init, x)
    return hs


def _ref_forward(X, p):
    h1 = _ref_lstm_layer(X, p["w_ih_l0"], p["w_hh_l0"], p["b_ih_l0"], p["b_hh_l0"])
    h2 = _ref_lstm_layer(h1, p["w_ih_l1"], p["w_hh_l1"], p["b_ih_l1"], p["b_hh_l1"])
    return h2[-1] @ p["fc_w"].T + p["fc_b"]


# ----------------------------------------------------------------------------
# Deterministic parameter init (PyTorch-style uniform(-1/sqrt(H), 1/sqrt(H)))
# ----------------------------------------------------------------------------
def init_params(key, n_features, hidden_size):
    H, F = hidden_size, n_features
    bound = 1.0 / jnp.sqrt(jnp.float32(H))
    keys = jax.random.split(key, 10)

    def u(k, shape):
        return jax.random.uniform(k, shape, jnp.float32, -bound, bound)

    return {
        "w_ih_l0": u(keys[0], (4 * H, F)),
        "w_hh_l0": u(keys[1], (4 * H, H)),
        "b_ih_l0": u(keys[2], (4 * H,)),
        "b_hh_l0": u(keys[3], (4 * H,)),
        "w_ih_l1": u(keys[4], (4 * H, H)),
        "w_hh_l1": u(keys[5], (4 * H, H)),
        "b_ih_l1": u(keys[6], (4 * H,)),
        "b_hh_l1": u(keys[7], (4 * H,)),
        "fc_w": u(keys[8], (1, H)),
        "fc_b": u(keys[9], (1,)),
    }


if __name__ == "__main__":
    n_features = 4
    hidden_size = 32
    seq_len = 8
    batch = 2

    key = jax.random.PRNGKey(0)
    k_x, k_p = jax.random.split(key)
    X = jax.random.normal(k_x, (seq_len, batch, n_features), dtype=jnp.float32)
    params = init_params(k_p, n_features, hidden_size)
    packed = pack_params(params)          # one-time weight packing, outside jit

    forward = jax.jit(lstm_module_forward)
    out = forward(X, packed)
    out = jax.block_until_ready(out)

    ref = _ref_forward(X, params)
    # bf16 MXU operands perturb results at ~1e-3; f32 gives exact 1e-4 parity.
    tol = 1e-4 if MXU_DTYPE == jnp.float32 else 2e-2
    assert out.shape == (batch, 1), out.shape
    assert jnp.allclose(out, ref, atol=tol, rtol=tol), (out, ref)

    print("KERNEL_OK")
</pallas_src>

<mosaic_0001>
module attributes {stable_mosaic.version = 11 : i64} {
  func.func @_fused_lstm_fc_kernel(%arg0: memref<16x4xf32, #tpu.memory_space<vmem>>, %arg1: memref<4x128xf32, #tpu.memory_space<vmem>>, %arg2: memref<1x128xf32, #tpu.memory_space<vmem>>, %arg3: memref<64x256xbf16, #tpu.memory_space<vmem>>, %arg4: memref<32x128xbf16, #tpu.memory_space<vmem>>, %arg5: memref<1x128xf32, #tpu.memory_space<vmem>>, %arg6: memref<1x32xf32, #tpu.memory_space<vmem>>, %arg7: memref<1x1xf32, #tpu.memory_space<vmem>>, %arg8: memref<2x1xf32, #tpu.memory_space<vmem>>) attributes {dimension_semantics = [], scalar_prefetch = 0 : i64, scratch_operands = 0 : i64, tpu.core_type = #tpu.core_type<tc>} {
    %c0 = arith.constant 0 : index
    %c0_0 = arith.constant 0 : index
    %0 = vector.load %arg0[%c0, %c0_0] : memref<16x4xf32, #tpu.memory_space<vmem>>, vector<16x4xf32>
    %c0_1 = arith.constant 0 : index
    %c0_2 = arith.constant 0 : index
    %1 = vector.load %arg1[%c0_1, %c0_2] : memref<4x128xf32, #tpu.memory_space<vmem>>, vector<4x128xf32>
    %cst = arith.constant dense<0.000000e+00> : vector<16x128xf32>
    %2 = tpu.matmul %0, %1, %cst {dimension_numbers = #tpu.dot_dimension_numbers<[1], [0], [0], [1], [0, 0, 1, 1], [], []>} : vector<16x4xf32>, vector<4x128xf32>, vector<16x128xf32> -> vector<16x128xf32>
    %c0_3 = arith.constant 0 : index
    %c0_4 = arith.constant 0 : index
    %3 = vector.load %arg2[%c0_3, %c0_4] : memref<1x128xf32, #tpu.memory_space<vmem>>, vector<1x128xf32>
    %4 = vector.broadcast %3 : vector<1x128xf32> to vector<16x128xf32>
    %5 = arith.addf %2, %4 : vector<16x128xf32>
    %c0_5 = arith.constant 0 : index
    %c0_6 = arith.constant 0 : index
    %6 = vector.load %arg3[%c0_5, %c0_6] : memref<64x256xbf16, #tpu.memory_space<vmem>>, vector<64x256xbf16>
    %c0_7 = arith.constant 0 : index
    %c0_8 = arith.constant 0 : index
    %7 = vector.load %arg4[%c0_7, %c0_8] : memref<32x128xbf16, #tpu.memory_space<vmem>>, vector<32x128xbf16>
    %c0_9 = arith.constant 0 : index
    %c0_10 = arith.constant 0 : index
    %8 = vector.load %arg5[%c0_9, %c0_10] : memref<1x128xf32, #tpu.memory_space<vmem>>, vector<1x128xf32>
    %cst_11 = arith.constant 0.000000e+00 : f32
    %9 = vector.broadcast %cst_11 : f32 to vector<2x32xf32>
    %cst_12 = arith.constant 0.000000e+00 : f32
    %10 = vector.broadcast %cst_12 : f32 to vector<2x64xf32>
    %11 = arith.truncf %10 : vector<2x64xf32> to vector<2x64xbf16>
    %cst_13 = arith.constant dense<0.000000e+00> : vector<2x256xf32>
    %12 = tpu.matmul %11, %6, %cst_13 {dimension_numbers = #tpu.dot_dimension_numbers<[1], [0], [0], [1], [0, 0, 1, 1], [], []>} : vector<2x64xbf16>, vector<64x256xbf16>, vector<2x256xf32> -> vector<2x256xf32>
    %13 = vector.extract_strided_slice %5 {offsets = [0, 0], sizes = [2, 128], strides = [1, 1]} : vector<16x128xf32> to vector<2x128xf32>
    %14 = vector.extract_strided_slice %12 {offsets = [0, 0], sizes = [2, 128], strides = [1, 1]} : vector<2x256xf32> to vector<2x128xf32>
    %15 = arith.addf %13, %14 : vector<2x128xf32>
    %16 = arith.negf %15 : vector<2x128xf32>
    %17 = math.exp %16 : vector<2x128xf32>
    %cst_14 = arith.constant 1.000000e+00 : f32
    %18 = vector.broadcast %cst_14 : f32 to vector<2x128xf32>
    %19 = arith.addf %18, %17 : vector<2x128xf32>
    %20 = arith.divf %18, %19 : vector<2x128xf32>
    %21 = math.tanh %15 : vector<2x128xf32>
    %22 = vector.extract_strided_slice %20 {offsets = [0, 0], sizes = [2, 32], strides = [1, 1]} : vector<2x128xf32> to vector<2x32xf32>
    %23 = vector.extract_strided_slice %20 {offsets = [0, 32], sizes = [2, 32], strides = [1, 1]} : vector<2x128xf32> to vector<2x32xf32>
    %24 = vector.extract_strided_slice %21 {offsets = [0, 64], sizes = [2, 32], strides = [1, 1]} : vector<2x128xf32> to vector<2x32xf32>
    %25 = vector.extract_strided_slice %20 {offsets = [0, 96], sizes = [2, 32], strides = [1, 1]} : vector<2x128xf32> to vector<2x32xf32>
    %26 = arith.mulf %23, %9 : vector<2x32xf32>
    %27 = arith.mulf %22, %24 : vector<2x32xf32>
    %28 = arith.addf %26, %27 : vector<2x32xf32>
    %29 = math.tanh %28 : vector<2x32xf32>
    %30 = arith.mulf %25, %29 : vector<2x32xf32>
    %31 = arith.truncf %30 : vector<2x32xf32> to vector<2x32xbf16>
    %cst_15 = arith.constant dense<0.000000e+00> : vector<2x128xf32>
    %32 = tpu.matmul %31, %7, %cst_15 {dimension_numbers = #tpu.dot_dimension_numbers<[1], [0], [0], [1], [0, 0, 1, 1], [], []>} : vector<2x32xbf16>, vector<32x128xbf16>, vector<2x128xf32> -> vector<2x128xf32>
    %33 = vector.extract_strided_slice %12 {offsets = [0, 128], sizes = [2, 128], strides = [1, 1]} : vector<2x256xf32> to vector<2x128xf32>
    %34 = arith.addf %32, %33 : vector<2x128xf32>
    %35 = vector.broadcast %8 : vector<1x128xf32> to vector<2x128xf32>
    %36 = arith.addf %34, %35 : vector<2x128xf32>
    %37 = arith.negf %36 : vector<2x128xf32>
    %38 = math.exp %37 : vector<2x128xf32>
    %cst_16 = arith.constant 1.000000e+00 : f32
    %39 = vector.broadcast %cst_16 : f32 to vector<2x128xf32>
    %40 = arith.addf %39, %38 : vector<2x128xf32>
    %41 = arith.divf %39, %40 : vector<2x128xf32>
    %42 = math.tanh %36 : vector<2x128xf32>
    %43 = vector.extract_strided_slice %41 {offsets = [0, 0], sizes = [2, 32], strides = [1, 1]} : vector<2x128xf32> to vector<2x32xf32>
    %44 = vector.extract_strided_slice %41 {offsets = [0, 32], sizes = [2, 32], strides = [1, 1]} : vector<2x128xf32> to vector<2x32xf32>
    %45 = vector.extract_strided_slice %42 {offsets = [0, 64], sizes = [2, 32], strides = [1, 1]} : vector<2x128xf32> to vector<2x32xf32>
    %46 = vector.extract_strided_slice %41 {offsets = [0, 96], sizes = [2, 32], strides = [1, 1]} : vector<2x128xf32> to vector<2x32xf32>
    %47 = arith.mulf %44, %9 : vector<2x32xf32>
    %48 = arith.mulf %43, %45 : vector<2x32xf32>
    %49 = arith.addf %47, %48 : vector<2x32xf32>
    %50 = math.tanh %49 : vector<2x32xf32>
    %51 = arith.mulf %46, %50 : vector<2x32xf32>
    %52 = tpu.concatenate %30, %51 in 1 : vector<2x32xf32>, vector<2x32xf32> -> vector<2x64xf32>
    %53 = arith.truncf %52 : vector<2x64xf32> to vector<2x64xbf16>
    %cst_17 = arith.constant dense<0.000000e+00> : vector<2x256xf32>
    %54 = tpu.matmul %53, %6, %cst_17 {dimension_numbers = #tpu.dot_dimension_numbers<[1], [0], [0], [1], [0, 0, 1, 1], [], []>} : vector<2x64xbf16>, vector<64x256xbf16>, vector<2x256xf32> -> vector<2x256xf32>
    %55 = vector.extract_strided_slice %5 {offsets = [2, 0], sizes = [2, 128], strides = [1, 1]} : vector<16x128xf32> to vector<2x128xf32>
    %56 = vector.extract_strided_slice %54 {offsets = [0, 0], sizes = [2, 128], strides = [1, 1]} : vector<2x256xf32> to vector<2x128xf32>
    %57 = arith.addf %55, %56 : vector<2x128xf32>
    %58 = arith.negf %57 : vector<2x128xf32>
    %59 = math.exp %58 : vector<2x128xf32>
    %cst_18 = arith.constant 1.000000e+00 : f32
    %60 = vector.broadcast %cst_18 : f32 to vector<2x128xf32>
    %61 = arith.addf %60, %59 : vector<2x128xf32>
    %62 = arith.divf %60, %61 : vector<2x128xf32>
    %63 = math.tanh %57 : vector<2x128xf32>
    %64 = vector.extract_strided_slice %62 {offsets = [0, 0], sizes = [2, 32], strides = [1, 1]} : vector<2x128xf32> to vector<2x32xf32>
    %65 = vector.extract_strided_slice %62 {offsets = [0, 32], sizes = [2, 32], strides = [1, 1]} : vector<2x128xf32> to vector<2x32xf32>
    %66 = vector.extract_strided_slice %63 {offsets = [0, 64], sizes = [2, 32], strides = [1, 1]} : vector<2x128xf32> to vector<2x32xf32>
    %67 = vector.extract_strided_slice %62 {offsets = [0, 96], sizes = [2, 32], strides = [1, 1]} : vector<2x128xf32> to vector<2x32xf32>
    %68 = arith.mulf %65, %28 : vector<2x32xf32>
    %69 = arith.mulf %64, %66 : vector<2x32xf32>
    %70 = arith.addf %68, %69 : vector<2x32xf32>
    %71 = math.tanh %70 : vector<2x32xf32>
    %72 = arith.mulf %67, %71 : vector<2x32xf32>
    %73 = arith.truncf %72 : vector<2x32xf32> to vector<2x32xbf16>
    %cst_19 = arith.constant dense<0.000000e+00> : vector<2x128xf32>
    %74 = tpu.matmul %73, %7, %cst_19 {dimension_numbers = #tpu.dot_dimension_numbers<[1], [0], [0], [1], [0, 0, 1, 1], [], []>} : vector<2x32xbf16>, vector<32x128xbf16>, vector<2x128xf32> -> vector<2x128xf32>
    %75 = vector.extract_strided_slice %54 {offsets = [0, 128], sizes = [2, 128], strides = [1, 1]} : vector<2x256xf32> to vector<2x128xf32>
    %76 = arith.addf %74, %75 : vector<2x128xf32>
    %77 = vector.broadcast %8 : vector<1x128xf32> to vector<2x128xf32>
    %78 = arith.addf %76, %77 : vector<2x128xf32>
    %79 = arith.negf %78 : vector<2x128xf32>
    %80 = math.exp %79 : vector<2x128xf32>
    %cst_20 = arith.constant 1.000000e+00 : f32
    %81 = vector.broadcast %cst_20 : f32 to vector<2x128xf32>
    %82 = arith.addf %81, %80 : vector<2x128xf32>
    %83 = arith.divf %81, %82 : vector<2x128xf32>
    %84 = math.tanh %78 : vector<2x128xf32>
    %85 = vector.extract_strided_slice %83 {offsets = [0, 0], sizes = [2, 32], strides = [1, 1]} : vector<2x128xf32> to vector<2x32xf32>
    %86 = vector.extract_strided_slice %83 {offsets = [0, 32], sizes = [2, 32], strides = [1, 1]} : vector<2x128xf32> to vector<2x32xf32>
    %87 = vector.extract_strided_slice %84 {offsets = [0, 64], sizes = [2, 32], strides = [1, 1]} : vector<2x128xf32> to vector<2x32xf32>
    %88 = vector.extract_strided_slice %83 {offsets = [0, 96], sizes = [2, 32], strides = [1, 1]} : vector<2x128xf32> to vector<2x32xf32>
    %89 = arith.mulf %86, %49 : vector<2x32xf32>
    %90 = arith.mulf %85, %87 : vector<2x32xf32>
    %91 = arith.addf %89, %90 : vector<2x32xf32>
    %92 = math.tanh %91 : vector<2x32xf32>
    %93 = arith.mulf %88, %92 : vector<2x32xf32>
    %94 = tpu.concatenate %72, %93 in 1 : vector<2x32xf32>, vector<2x32xf32> -> vector<2x64xf32>
    %95 = arith.truncf %94 : vector<2x64xf32> to vector<2x64xbf16>
    %cst_21 = arith.constant dense<0.000000e+00> : vector<2x256xf32>
    %96 = tpu.matmul %95, %6, %cst_21 {dimension_numbers = #tpu.dot_dimension_numbers<[1], [0], [0], [1], [0, 0, 1, 1], [], []>} : vector<2x64xbf16>, vector<64x256xbf16>, vector<2x256xf32> -> vector<2x256xf32>
    %97 = vector.extract_strided_slice %5 {offsets = [4, 0], sizes = [2, 128], strides = [1, 1]} : vector<16x128xf32> to vector<2x128xf32>
    %98 = vector.extract_strided_slice %96 {offsets = [0, 0], sizes = [2, 128], strides = [1, 1]} : vector<2x256xf32> to vector<2x128xf32>
    %99 = arith.addf %97, %98 : vector<2x128xf32>
    %100 = arith.negf %99 : vector<2x128xf32>
    %101 = math.exp %100 : vector<2x128xf32>
    %cst_22 = arith.constant 1.000000e+00 : f32
    %102 = vector.broadcast %cst_22 : f32 to vector<2x128xf32>
    %103 = arith.addf %102, %101 : vector<2x128xf32>
    %104 = arith.divf %102, %103 : vector<2x128xf32>
    %105 = math.tanh %99 : vector<2x128xf32>
    %106 = vector.extract_strided_slice %104 {offsets = [0, 0], sizes = [2, 32], strides = [1, 1]} : vector<2x128xf32> to vector<2x32xf32>
    %107 = vector.extract_strided_slice %104 {offsets = [0, 32], sizes = [2, 32], strides = [1, 1]} : vector<2x128xf32> to vector<2x32xf32>
    %108 = vector.extract_strided_slice %105 {offsets = [0, 64], sizes = [2, 32], strides = [1, 1]} : vector<2x128xf32> to vector<2x32xf32>
    %109 = vector.extract_strided_slice %104 {offsets = [0, 96], sizes = [2, 32], strides = [1, 1]} : vector<2x128xf32> to vector<2x32xf32>
    %110 = arith.mulf %107, %70 : vector<2x32xf32>
    %111 = arith.mulf %106, %108 : vector<2x32xf32>
    %112 = arith.addf %110, %111 : vector<2x32xf32>
    %113 = math.tanh %112 : vector<2x32xf32>
    %114 = arith.mulf %109, %113 : vector<2x32xf32>
    %115 = arith.truncf %114 : vector<2x32xf32> to vector<2x32xbf16>
    %cst_23 = arith.constant dense<0.000000e+00> : vector<2x128xf32>
    %116 = tpu.matmul %115, %7, %cst_23 {dimension_numbers = #tpu.dot_dimension_numbers<[1], [0], [0], [1], [0, 0, 1, 1], [], []>} : vector<2x32xbf16>, vector<32x128xbf16>, vector<2x128xf32> -> vector<2x128xf32>
    %117 = vector.extract_strided_slice %96 {offsets = [0, 128], sizes = [2, 128], strides = [1, 1]} : vector<2x256xf32> to vector<2x128xf32>
    %118 = arith.addf %116, %117 : vector<2x128xf32>
    %119 = vector.broadcast %8 : vector<1x128xf32> to vector<2x128xf32>
    %120 = arith.addf %118, %119 : vector<2x128xf32>
    %121 = arith.negf %120 : vector<2x128xf32>
    %122 = math.exp %121 : vector<2x128xf32>
    %cst_24 = arith.constant 1.000000e+00 : f32
    %123 = vector.broadcast %cst_24 : f32 to vector<2x128xf32>
    %124 = arith.addf %123, %122 : vector<2x128xf32>
    %125 = arith.divf %123, %124 : vector<2x128xf32>
    %126 = math.tanh %120 : vector<2x128xf32>
    %127 = vector.extract_strided_slice %125 {offsets = [0, 0], sizes = [2, 32], strides = [1, 1]} : vector<2x128xf32> to vector<2x32xf32>
    %128 = vector.extract_strided_slice %125 {offsets = [0, 32], sizes = [2, 32], strides = [1, 1]} : vector<2x128xf32> to vector<2x32xf32>
    %129 = vector.extract_strided_slice %126 {offsets = [0, 64], sizes = [2, 32], strides = [1, 1]} : vector<2x128xf32> to vector<2x32xf32>
    %130 = vector.extract_strided_slice %125 {offsets = [0, 96], sizes = [2, 32], strides = [1, 1]} : vector<2x128xf32> to vector<2x32xf32>
    %131 = arith.mulf %128, %91 : vector<2x32xf32>
    %132 = arith.mulf %127, %129 : vector<2x32xf32>
    %133 = arith.addf %131, %132 : vector<2x32xf32>
    %134 = math.tanh %133 : vector<2x32xf32>
    %135 = arith.mulf %130, %134 : vector<2x32xf32>
    %136 = tpu.concatenate %114, %135 in 1 : vector<2x32xf32>, vector<2x32xf32> -> vector<2x64xf32>
    %137 = arith.truncf %136 : vector<2x64xf32> to vector<2x64xbf16>
    %cst_25 = arith.constant dense<0.000000e+00> : vector<2x256xf32>
    %138 = tpu.matmul %137, %6, %cst_25 {dimension_numbers = #tpu.dot_dimension_numbers<[1], [0], [0], [1], [0, 0, 1, 1], [], []>} : vector<2x64xbf16>, vector<64x256xbf16>, vector<2x256xf32> -> vector<2x256xf32>
    %139 = vector.extract_strided_slice %5 {offsets = [6, 0], sizes = [2, 128], strides = [1, 1]} : vector<16x128xf32> to vector<2x128xf32>
    %140 = vector.extract_strided_slice %138 {offsets = [0, 0], sizes = [2, 128], strides = [1, 1]} : vector<2x256xf32> to vector<2x128xf32>
    %141 = arith.addf %139, %140 : vector<2x128xf32>
    %142 = arith.negf %141 : vector<2x128xf32>
    %143 = math.exp %142 : vector<2x128xf32>
    %cst_26 = arith.constant 1.000000e+00 : f32
    %144 = vector.broadcast %cst_26 : f32 to vector<2x128xf32>
    %145 = arith.addf %144, %143 : vector<2x128xf32>
    %146 = arith.divf %144, %145 : vector<2x128xf32>
    %147 = math.tanh %141 : vector<2x128xf32>
    %148 = vector.extract_strided_slice %146 {offsets = [0, 0], sizes = [2, 32], strides = [1, 1]} : vector<2x128xf32> to vector<2x32xf32>
    %149 = vector.extract_strided_slice %146 {offsets = [0, 32], sizes = [2, 32], strides = [1, 1]} : vector<2x128xf32> to vector<2x32xf32>
    %150 = vector.extract_strided_slice %147 {offsets = [0, 64], sizes = [2, 32], strides = [1, 1]} : vector<2x128xf32> to vector<2x32xf32>
    %151 = vector.extract_strided_slice %146 {offsets = [0, 96], sizes = [2, 32], strides = [1, 1]} : vector<2x128xf32> to vector<2x32xf32>
    %152 = arith.mulf %149, %112 : vector<2x32xf32>
    %153 = arith.mulf %148, %150 : vector<2x32xf32>
    %154 = arith.addf %152, %153 : vector<2x32xf32>
    %155 = math.tanh %154 : vector<2x32xf32>
    %156 = arith.mulf %151, %155 : vector<2x32xf32>
    %157 = arith.truncf %156 : vector<2x32xf32> to vector<2x32xbf16>
    %cst_27 = arith.constant dense<0.000000e+00> : vector<2x128xf32>
    %158 = tpu.matmul %157, %7, %cst_27 {dimension_numbers = #tpu.dot_dimension_numbers<[1], [0], [0], [1], [0, 0, 1, 1], [], []>} : vector<2x32xbf16>, vector<32x128xbf16>, vector<2x128xf32> -> vector<2x128xf32>
    %159 = vector.extract_strided_slice %138 {offsets = [0, 128], sizes = [2, 128], strides = [1, 1]} : vector<2x256xf32> to vector<2x128xf32>
    %160 = arith.addf %158, %159 : vector<2x128xf32>
    %161 = vector.broadcast %8 : vector<1x128xf32> to vector<2x128xf32>
    %162 = arith.addf %160, %161 : vector<2x128xf32>
    %163 = arith.negf %162 : vector<2x128xf32>
    %164 = math.exp %163 : vector<2x128xf32>
    %cst_28 = arith.constant 1.000000e+00 : f32
    %165 = vector.broadcast %cst_28 : f32 to vector<2x128xf32>
    %166 = arith.addf %165, %164 : vector<2x128xf32>
    %167 = arith.divf %165, %166 : vector<2x128xf32>
    %168 = math.tanh %162 : vector<2x128xf32>
    %169 = vector.extract_strided_slice %167 {offsets = [0, 0], sizes = [2, 32], strides = [1, 1]} : vector<2x128xf32> to vector<2x32xf32>
    %170 = vector.extract_strided_slice %167 {offsets = [0, 32], sizes = [2, 32], strides = [1, 1]} : vector<2x128xf32> to vector<2x32xf32>
    %171 = vector.extract_strided_slice %168 {offsets = [0, 64], sizes = [2, 32], strides = [1, 1]} : vector<2x128xf32> to vector<2x32xf32>
    %172 = vector.extract_strided_slice %167 {offsets = [0, 96], sizes = [2, 32], strides = [1, 1]} : vector<2x128xf32> to vector<2x32xf32>
    %173 = arith.mulf %170, %133 : vector<2x32xf32>
    %174 = arith.mulf %169, %171 : vector<2x32xf32>
    %175 = arith.addf %173, %174 : vector<2x32xf32>
    %176 = math.tanh %175 : vector<2x32xf32>
    %177 = arith.mulf %172, %176 : vector<2x32xf32>
    %178 = tpu.concatenate %156, %177 in 1 : vector<2x32xf32>, vector<2x32xf32> -> vector<2x64xf32>
    %179 = arith.truncf %178 : vector<2x64xf32> to vector<2x64xbf16>
    %cst_29 = arith.constant dense<0.000000e+00> : vector<2x256xf32>
    %180 = tpu.matmul %179, %6, %cst_29 {dimension_numbers = #tpu.dot_dimension_numbers<[1], [0], [0], [1], [0, 0, 1, 1], [], []>} : vector<2x64xbf16>, vector<64x256xbf16>, vector<2x256xf32> -> vector<2x256xf32>
    %181 = vector.extract_strided_slice %5 {offsets = [8, 0], sizes = [2, 128], strides = [1, 1]} : vector<16x128xf32> to vector<2x128xf32>
    %182 = vector.extract_strided_slice %180 {offsets = [0, 0], sizes = [2, 128], strides = [1, 1]} : vector<2x256xf32> to vector<2x128xf32>
    %183 = arith.addf %181, %182 : vector<2x128xf32>
    %184 = arith.negf %183 : vector<2x128xf32>
    %185 = math.exp %184 : vector<2x128xf32>
    %cst_30 = arith.constant 1.000000e+00 : f32
    %186 = vector.broadcast %cst_30 : f32 to vector<2x128xf32>
    %187 = arith.addf %186, %185 : vector<2x128xf32>
    %188 = arith.divf %186, %187 : vector<2x128xf32>
    %189 = math.tanh %183 : vector<2x128xf32>
    %190 = vector.extract_strided_slice %188 {offsets = [0, 0], sizes = [2, 32], strides = [1, 1]} : vector<2x128xf32> to vector<2x32xf32>
    %191 = vector.extract_strided_slice %188 {offsets = [0, 32], sizes = [2, 32], strides = [1, 1]} : vector<2x128xf32> to vector<2x32xf32>
    %192 = vector.extract_strided_slice %189 {offsets = [0, 64], sizes = [2, 32], strides = [1, 1]} : vector<2x128xf32> to vector<2x32xf32>
    %193 = vector.extract_strided_slice %188 {offsets = [0, 96], sizes = [2, 32], strides = [1, 1]} : vector<2x128xf32> to vector<2x32xf32>
    %194 = arith.mulf %191, %154 : vector<2x32xf32>
    %195 = arith.mulf %190, %192 : vector<2x32xf32>
    %196 = arith.addf %194, %195 : vector<2x32xf32>
    %197 = math.tanh %196 : vector<2x32xf32>
    %198 = arith.mulf %193, %197 : vector<2x32xf32>
    %199 = arith.truncf %198 : vector<2x32xf32> to vector<2x32xbf16>
    %cst_31 = arith.constant dense<0.000000e+00> : vector<2x128xf32>
    %200 = tpu.matmul %199, %7, %cst_31 {dimension_numbers = #tpu.dot_dimension_numbers<[1], [0], [0], [1], [0, 0, 1, 1], [], []>} : vector<2x32xbf16>, vector<32x128xbf16>, vector<2x128xf32> -> vector<2x128xf32>
    %201 = vector.extract_strided_slice %180 {offsets = [0, 128], sizes = [2, 128], strides = [1, 1]} : vector<2x256xf32> to vector<2x128xf32>
    %202 = arith.addf %200, %201 : vector<2x128xf32>
    %203 = vector.broadcast %8 : vector<1x128xf32> to vector<2x128xf32>
    %204 = arith.addf %202, %203 : vector<2x128xf32>
    %205 = arith.negf %204 : vector<2x128xf32>
    %206 = math.exp %205 : vector<2x128xf32>
    %cst_32 = arith.constant 1.000000e+00 : f32
    %207 = vector.broadcast %cst_32 : f32 to vector<2x128xf32>
    %208 = arith.addf %207, %206 : vector<2x128xf32>
    %209 = arith.divf %207, %208 : vector<2x128xf32>
    %210 = math.tanh %204 : vector<2x128xf32>
    %211 = vector.extract_strided_slice %209 {offsets = [0, 0], sizes = [2, 32], strides = [1, 1]} : vector<2x128xf32> to vector<2x32xf32>
    %212 = vector.extract_strided_slice %209 {offsets = [0, 32], sizes = [2, 32], strides = [1, 1]} : vector<2x128xf32> to vector<2x32xf32>
    %213 = vector.extract_strided_slice %210 {offsets = [0, 64], sizes = [2, 32], strides = [1, 1]} : vector<2x128xf32> to vector<2x32xf32>
    %214 = vector.extract_strided_slice %209 {offsets = [0, 96], sizes = [2, 32], strides = [1, 1]} : vector<2x128xf32> to vector<2x32xf32>
    %215 = arith.mulf %212, %175 : vector<2x32xf32>
    %216 = arith.mulf %211, %213 : vector<2x32xf32>
    %217 = arith.addf %215, %216 : vector<2x32xf32>
    %218 = math.tanh %217 : vector<2x32xf32>
    %219 = arith.mulf %214, %218 : vector<2x32xf32>
    %220 = tpu.concatenate %198, %219 in 1 : vector<2x32xf32>, vector<2x32xf32> -> vector<2x64xf32>
    %221 = arith.truncf %220 : vector<2x64xf32> to vector<2x64xbf16>
    %cst_33 = arith.constant dense<0.000000e+00> : vector<2x256xf32>
    %222 = tpu.matmul %221, %6, %cst_33 {dimension_numbers = #tpu.dot_dimension_numbers<[1], [0], [0], [1], [0, 0, 1, 1], [], []>} : vector<2x64xbf16>, vector<64x256xbf16>, vector<2x256xf32> -> vector<2x256xf32>
    %223 = vector.extract_strided_slice %5 {offsets = [10, 0], sizes = [2, 128], strides = [1, 1]} : vector<16x128xf32> to vector<2x128xf32>
    %224 = vector.extract_strided_slice %222 {offsets = [0, 0], sizes = [2, 128], strides = [1, 1]} : vector<2x256xf32> to vector<2x128xf32>
    %225 = arith.addf %223, %224 : vector<2x128xf32>
    %226 = arith.negf %225 : vector<2x128xf32>
    %227 = math.exp %226 : vector<2x128xf32>
    %cst_34 = arith.constant 1.000000e+00 : f32
    %228 = vector.broadcast %cst_34 : f32 to vector<2x128xf32>
    %229 = arith.addf %228, %227 : vector<2x128xf32>
    %230 = arith.divf %228, %229 : vector<2x128xf32>
    %231 = math.tanh %225 : vector<2x128xf32>
    %232 = vector.extract_strided_slice %230 {offsets = [0, 0], sizes = [2, 32], strides = [1, 1]} : vector<2x128xf32> to vector<2x32xf32>
    %233 = vector.extract_strided_slice %230 {offsets = [0, 32], sizes = [2, 32], strides = [1, 1]} : vector<2x128xf32> to vector<2x32xf32>
    %234 = vector.extract_strided_slice %231 {offsets = [0, 64], sizes = [2, 32], strides = [1, 1]} : vector<2x128xf32> to vector<2x32xf32>
    %235 = vector.extract_strided_slice %230 {offsets = [0, 96], sizes = [2, 32], strides = [1, 1]} : vector<2x128xf32> to vector<2x32xf32>
    %236 = arith.mulf %233, %196 : vector<2x32xf32>
    %237 = arith.mulf %232, %234 : vector<2x32xf32>
    %238 = arith.addf %236, %237 : vector<2x32xf32>
    %239 = math.tanh %238 : vector<2x32xf32>
    %240 = arith.mulf %235, %239 : vector<2x32xf32>
    %241 = arith.truncf %240 : vector<2x32xf32> to vector<2x32xbf16>
    %cst_35 = arith.constant dense<0.000000e+00> : vector<2x128xf32>
    %242 = tpu.matmul %241, %7, %cst_35 {dimension_numbers = #tpu.dot_dimension_numbers<[1], [0], [0], [1], [0, 0, 1, 1], [], []>} : vector<2x32xbf16>, vector<32x128xbf16>, vector<2x128xf32> -> vector<2x128xf32>
    %243 = vector.extract_strided_slice %222 {offsets = [0, 128], sizes = [2, 128], strides = [1, 1]} : vector<2x256xf32> to vector<2x128xf32>
    %244 = arith.addf %242, %243 : vector<2x128xf32>
    %245 = vector.broadcast %8 : vector<1x128xf32> to vector<2x128xf32>
    %246 = arith.addf %244, %245 : vector<2x128xf32>
    %247 = arith.negf %246 : vector<2x128xf32>
    %248 = math.exp %247 : vector<2x128xf32>
    %cst_36 = arith.constant 1.000000e+00 : f32
    %249 = vector.broadcast %cst_36 : f32 to vector<2x128xf32>
    %250 = arith.addf %249, %248 : vector<2x128xf32>
    %251 = arith.divf %249, %250 : vector<2x128xf32>
    %252 = math.tanh %246 : vector<2x128xf32>
    %253 = vector.extract_strided_slice %251 {offsets = [0, 0], sizes = [2, 32], strides = [1, 1]} : vector<2x128xf32> to vector<2x32xf32>
    %254 = vector.extract_strided_slice %251 {offsets = [0, 32], sizes = [2, 32], strides = [1, 1]} : vector<2x128xf32> to vector<2x32xf32>
    %255 = vector.extract_strided_slice %252 {offsets = [0, 64], sizes = [2, 32], strides = [1, 1]} : vector<2x128xf32> to vector<2x32xf32>
    %256 = vector.extract_strided_slice %251 {offsets = [0, 96], sizes = [2, 32], strides = [1, 1]} : vector<2x128xf32> to vector<2x32xf32>
    %257 = arith.mulf %254, %217 : vector<2x32xf32>
    %258 = arith.mulf %253, %255 : vector<2x32xf32>
    %259 = arith.addf %257, %258 : vector<2x32xf32>
    %260 = math.tanh %259 : vector<2x32xf32>
    %261 = arith.mulf %256, %260 : vector<2x32xf32>
    %262 = tpu.concatenate %240, %261 in 1 : vector<2x32xf32>, vector<2x32xf32> -> vector<2x64xf32>
    %263 = arith.truncf %262 : vector<2x64xf32> to vector<2x64xbf16>
    %cst_37 = arith.constant dense<0.000000e+00> : vector<2x256xf32>
    %264 = tpu.matmul %263, %6, %cst_37 {dimension_numbers = #tpu.dot_dimension_numbers<[1], [0], [0], [1], [0, 0, 1, 1], [], []>} : vector<2x64xbf16>, vector<64x256xbf16>, vector<2x256xf32> -> vector<2x256xf32>
    %265 = vector.extract_strided_slice %5 {offsets = [12, 0], sizes = [2, 128], strides = [1, 1]} : vector<16x128xf32> to vector<2x128xf32>
    %266 = vector.extract_strided_slice %264 {offsets = [0, 0], sizes = [2, 128], strides = [1, 1]} : vector<2x256xf32> to vector<2x128xf32>
    %267 = arith.addf %265, %266 : vector<2x128xf32>
    %268 = arith.negf %267 : vector<2x128xf32>
    %269 = math.exp %268 : vector<2x128xf32>
    %cst_38 = arith.constant 1.000000e+00 : f32
    %270 = vector.broadcast %cst_38 : f32 to vector<2x128xf32>
    %271 = arith.addf %270, %269 : vector<2x128xf32>
    %272 = arith.divf %270, %271 : vector<2x128xf32>
    %273 = math.tanh %267 : vector<2x128xf32>
    %274 = vector.extract_strided_slice %272 {offsets = [0, 0], sizes = [2, 32], strides = [1, 1]} : vector<2x128xf32> to vector<2x32xf32>
    %275 = vector.extract_strided_slice %272 {offsets = [0, 32], sizes = [2, 32], strides = [1, 1]} : vector<2x128xf32> to vector<2x32xf32>
    %276 = vector.extract_strided_slice %273 {offsets = [0, 64], sizes = [2, 32], strides = [1, 1]} : vector<2x128xf32> to vector<2x32xf32>
    %277 = vector.extract_strided_slice %272 {offsets = [0, 96], sizes = [2, 32], strides = [1, 1]} : vector<2x128xf32> to vector<2x32xf32>
    %278 = arith.mulf %275, %238 : vector<2x32xf32>
    %279 = arith.mulf %274, %276 : vector<2x32xf32>
    %280 = arith.addf %278, %279 : vector<2x32xf32>
    %281 = math.tanh %280 : vector<2x32xf32>
    %282 = arith.mulf %277, %281 : vector<2x32xf32>
    %283 = arith.truncf %282 : vector<2x32xf32> to vector<2x32xbf16>
    %cst_39 = arith.constant dense<0.000000e+00> : vector<2x128xf32>
    %284 = tpu.matmul %283, %7, %cst_39 {dimension_numbers = #tpu.dot_dimension_numbers<[1], [0], [0], [1], [0, 0, 1, 1], [], []>} : vector<2x32xbf16>, vector<32x128xbf16>, vector<2x128xf32> -> vector<2x128xf32>
    %285 = vector.extract_strided_slice %264 {offsets = [0, 128], sizes = [2, 128], strides = [1, 1]} : vector<2x256xf32> to vector<2x128xf32>
    %286 = arith.addf %284, %285 : vector<2x128xf32>
    %287 = vector.broadcast %8 : vector<1x128xf32> to vector<2x128xf32>
    %288 = arith.addf %286, %287 : vector<2x128xf32>
    %289 = arith.negf %288 : vector<2x128xf32>
    %290 = math.exp %289 : vector<2x128xf32>
    %cst_40 = arith.constant 1.000000e+00 : f32
    %291 = vector.broadcast %cst_40 : f32 to vector<2x128xf32>
    %292 = arith.addf %291, %290 : vector<2x128xf32>
    %293 = arith.divf %291, %292 : vector<2x128xf32>
    %294 = math.tanh %288 : vector<2x128xf32>
    %295 = vector.extract_strided_slice %293 {offsets = [0, 0], sizes = [2, 32], strides = [1, 1]} : vector<2x128xf32> to vector<2x32xf32>
    %296 = vector.extract_strided_slice %293 {offsets = [0, 32], sizes = [2, 32], strides = [1, 1]} : vector<2x128xf32> to vector<2x32xf32>
    %297 = vector.extract_strided_slice %294 {offsets = [0, 64], sizes = [2, 32], strides = [1, 1]} : vector<2x128xf32> to vector<2x32xf32>
    %298 = vector.extract_strided_slice %293 {offsets = [0, 96], sizes = [2, 32], strides = [1, 1]} : vector<2x128xf32> to vector<2x32xf32>
    %299 = arith.mulf %296, %259 : vector<2x32xf32>
    %300 = arith.mulf %295, %297 : vector<2x32xf32>
    %301 = arith.addf %299, %300 : vector<2x32xf32>
    %302 = math.tanh %301 : vector<2x32xf32>
    %303 = arith.mulf %298, %302 : vector<2x32xf32>
    %304 = tpu.concatenate %282, %303 in 1 : vector<2x32xf32>, vector<2x32xf32> -> vector<2x64xf32>
    %305 = arith.truncf %304 : vector<2x64xf32> to vector<2x64xbf16>
    %cst_41 = arith.constant dense<0.000000e+00> : vector<2x256xf32>
    %306 = tpu.matmul %305, %6, %cst_41 {dimension_numbers = #tpu.dot_dimension_numbers<[1], [0], [0], [1], [0, 0, 1, 1], [], []>} : vector<2x64xbf16>, vector<64x256xbf16>, vector<2x256xf32> -> vector<2x256xf32>
    %307 = vector.extract_strided_slice %5 {offsets = [14, 0], sizes = [2, 128], strides = [1, 1]} : vector<16x128xf32> to vector<2x128xf32>
    %308 = vector.extract_strided_slice %306 {offsets = [0, 0], sizes = [2, 128], strides = [1, 1]} : vector<2x256xf32> to vector<2x128xf32>
    %309 = arith.addf %307, %308 : vector<2x128xf32>
    %310 = arith.negf %309 : vector<2x128xf32>
    %311 = math.exp %310 : vector<2x128xf32>
    %cst_42 = arith.constant 1.000000e+00 : f32
    %312 = vector.broadcast %cst_42 : f32 to vector<2x128xf32>
    %313 = arith.addf %312, %311 : vector<2x128xf32>
    %314 = arith.divf %312, %313 : vector<2x128xf32>
    %315 = math.tanh %309 : vector<2x128xf32>
    %316 = vector.extract_strided_slice %314 {offsets = [0, 0], sizes = [2, 32], strides = [1, 1]} : vector<2x128xf32> to vector<2x32xf32>
    %317 = vector.extract_strided_slice %314 {offsets = [0, 32], sizes = [2, 32], strides = [1, 1]} : vector<2x128xf32> to vector<2x32xf32>
    %318 = vector.extract_strided_slice %315 {offsets = [0, 64], sizes = [2, 32], strides = [1, 1]} : vector<2x128xf32> to vector<2x32xf32>
    %319 = vector.extract_strided_slice %314 {offsets = [0, 96], sizes = [2, 32], strides = [1, 1]} : vector<2x128xf32> to vector<2x32xf32>
    %320 = arith.mulf %317, %280 : vector<2x32xf32>
    %321 = arith.mulf %316, %318 : vector<2x32xf32>
    %322 = arith.addf %320, %321 : vector<2x32xf32>
    %323 = math.tanh %322 : vector<2x32xf32>
    %324 = arith.mulf %319, %323 : vector<2x32xf32>
    %325 = arith.truncf %324 : vector<2x32xf32> to vector<2x32xbf16>
    %cst_43 = arith.constant dense<0.000000e+00> : vector<2x128xf32>
    %326 = tpu.matmul %325, %7, %cst_43 {dimension_numbers = #tpu.dot_dimension_numbers<[1], [0], [0], [1], [0, 0, 1, 1], [], []>} : vector<2x32xbf16>, vector<32x128xbf16>, vector<2x128xf32> -> vector<2x128xf32>
    %327 = vector.extract_strided_slice %306 {offsets = [0, 128], sizes = [2, 128], strides = [1, 1]} : vector<2x256xf32> to vector<2x128xf32>
    %328 = arith.addf %326, %327 : vector<2x128xf32>
    %329 = vector.broadcast %8 : vector<1x128xf32> to vector<2x128xf32>
    %330 = arith.addf %328, %329 : vector<2x128xf32>
    %331 = arith.negf %330 : vector<2x128xf32>
    %332 = math.exp %331 : vector<2x128xf32>
    %cst_44 = arith.constant 1.000000e+00 : f32
    %333 = vector.broadcast %cst_44 : f32 to vector<2x128xf32>
    %334 = arith.addf %333, %332 : vector<2x128xf32>
    %335 = arith.divf %333, %334 : vector<2x128xf32>
    %336 = math.tanh %330 : vector<2x128xf32>
    %337 = vector.extract_strided_slice %335 {offsets = [0, 0], sizes = [2, 32], strides = [1, 1]} : vector<2x128xf32> to vector<2x32xf32>
    %338 = vector.extract_strided_slice %335 {offsets = [0, 32], sizes = [2, 32], strides = [1, 1]} : vector<2x128xf32> to vector<2x32xf32>
    %339 = vector.extract_strided_slice %336 {offsets = [0, 64], sizes = [2, 32], strides = [1, 1]} : vector<2x128xf32> to vector<2x32xf32>
    %340 = vector.extract_strided_slice %335 {offsets = [0, 96], sizes = [2, 32], strides = [1, 1]} : vector<2x128xf32> to vector<2x32xf32>
    %341 = arith.mulf %338, %301 : vector<2x32xf32>
    %342 = arith.mulf %337, %339 : vector<2x32xf32>
    %343 = arith.addf %341, %342 : vector<2x32xf32>
    %344 = math.tanh %343 : vector<2x32xf32>
    %345 = arith.mulf %340, %344 : vector<2x32xf32>
    %c0_45 = arith.constant 0 : index
    %c0_46 = arith.constant 0 : index
    %346 = vector.load %arg6[%c0_45, %c0_46] : memref<1x32xf32, #tpu.memory_space<vmem>>, vector<1x32xf32>
    %347 = vector.broadcast %346 : vector<1x32xf32> to vector<2x32xf32>
    %348 = arith.mulf %345, %347 : vector<2x32xf32>
    %cst_47 = arith.constant dense<0.000000e+00> : vector<2xf32>
    %349 = vector.multi_reduction <add>, %348, %cst_47 [1] : vector<2x32xf32> to vector<2xf32>
    %350 = vector.shape_cast %349 : vector<2xf32> to vector<2x1xf32>
    %c0_48 = arith.constant 0 : index
    %c0_49 = arith.constant 0 : index
    %351 = vector.load %arg7[%c0_48, %c0_49] : memref<1x1xf32, #tpu.memory_space<vmem>>, vector<1x1xf32>
    %352 = vector.broadcast %351 : vector<1x1xf32> to vector<2x1xf32>
    %353 = arith.addf %350, %352 : vector<2x1xf32>
    %c0_50 = arith.constant 0 : index
    %c0_51 = arith.constant 0 : index
    %354 = vector.load %arg8[%c0_50, %c0_51] : memref<2x1xf32, #tpu.memory_space<vmem>>, vector<2x1xf32>
    tpu.vector_store %arg8[%c0_50, %c0_51], %353 {strides = array<i32>} : memref<2x1xf32, #tpu.memory_space<vmem>>, vector<2x1xf32>,
    return
  }
}

</mosaic_0001>

<llo_original>
// kernel: lstm_module_forward.1
$region0: #{lstm_module_forward.1}
  #allocation0 [shape = 'u32[]', space=smem, size = 0x4, offset = 0x4, fixed_abs, tag = 'smem constant byte address 0x4 - core index']
  #allocation1 [shape = 'u32[72,128]{1,0:T(1,128)}', space=vmem, size = 0x9000, scoped, tag = 'internal scratch']
  #allocation2 [shape = 'f32[1,1]{1,0:T(1,128)S(1)}', space=vmem, size = 0x200, scoped, tag = 'scoped memory for lstm_module_forward.1']
  %s0 = inlined_call_operand.vmem [shape: f32[16,4], index: 0, kind: input, shape index: {}]
  %s1 = inlined_call_operand.vmem [shape: f32[4,128], index: 1, kind: input, shape index: {}]
  %s2 = inlined_call_operand.vmem [shape: f32[1,128], index: 2, kind: input, shape index: {}]
  %s3 = inlined_call_operand.hbm [shape: bf16[64,256], index: 3, kind: input, shape index: {}]
  %s4 = inlined_call_operand.vmem [shape: bf16[32,128], index: 4, kind: input, shape index: {}]
  %s5 = inlined_call_operand.vmem [shape: f32[1,128], index: 5, kind: input, shape index: {}]
  %s6 = inlined_call_operand.vmem [shape: f32[1,32], index: 6, kind: input, shape index: {}]
  %s7 = inlined_call_operand.<no memory space> [shape: f32[1,1], index: 7, kind: input, shape index: {}]
  %s8 = inlined_call_operand.vmem [shape: f32[2,1], index: 8, kind: output, shape index: {}]
  %s9 = sld [smem:[#allocation0]]
  $region46: #{lstm_module_forward.1} parent=0
    _
  %s11 = ssub.s32 1, %s9
  %s12 = scalar_select 0, %s11, %s9
  %v13 = vstv %s7
  %14 = vst [vmem:[#allocation2] sm:$0x1] %v13
  $region1: #{lstm_module_forward.1} parent=0
    #allocation3 [shape = 'u8[32768]{0}', space=vmem, size = 0x8000, scoped, tag = 'input window, operand 3, single buffered']
    #allocation4 [shape = 's32[1]{0}', space=sflag, size = 0x4, scoped, tag = 'scoped memory for lstm_module_forward.1']
    %15 = vsyncpa [#allocation4], 0
    // Predicated region
    $region2: #{lstm_module_forward.1} parent=1 // pred_check
      _
    $region3: #{lstm_module_forward.1} parent=1 // pred_check_branch
      %17 = sbr.rel (0) target = $region5
    $region4: #{lstm_module_forward.1} parent=1 // pred_region
      _
    $region5: #{lstm_module_forward.1} parent=1 // pred_fallthru
      _
    // Predicated region
    $region6: #{lstm_module_forward.1} parent=1 // pred_check
      _
    $region7: #{lstm_module_forward.1} parent=1 // pred_check_branch
      %19 = sbr.rel (0) target = $region9
    $region8: #{lstm_module_forward.1} parent=1 // pred_region
      _
    $region9: #{lstm_module_forward.1} parent=1 // pred_fallthru
      _
    // Predicated region
    $region10: #{lstm_module_forward.1} parent=1 // pred_check
      _
    $region11: #{lstm_module_forward.1} parent=1 // pred_check_branch
      %21 = sbr.rel (0) target = $region13
    $region12: #{lstm_module_forward.1} parent=1 // pred_region
      _
    $region13: #{lstm_module_forward.1} parent=1 // pred_fallthru
      _
    // Predicated region
    $region14: #{lstm_module_forward.1} parent=1 // pred_check
      _
    $region15: #{lstm_module_forward.1} parent=1 // pred_check_branch
      %23 = sbr.rel (0) target = $region17
    $region16: #{lstm_module_forward.1} parent=1 // pred_region
      %25 = vsyncadd [#allocation4], 0
      %s26 = sshll.u32 %s3, 4
      %s27 = int_to_ptr.hbm [resolvable:$true] %s26
      %s28 = sshll.u32 [#allocation3], 4
      %s29 = int_to_ptr.vmem [resolvable:$true] %s28
      %34 = dma.hbm_to_vmem [thread:$0]  %s27, 1024, %s29, [#allocation4], 128, 128, 8
    $region17: #{lstm_module_forward.1} parent=1 // pred_fallthru
      _
    // Predicated region
    $region18: #{lstm_module_forward.1} parent=1 // pred_check
      _
    $region19: #{lstm_module_forward.1} parent=1 // pred_check_branch
      %36 = sbr.rel (0) target = $region21
    $region20: #{lstm_module_forward.1} parent=1 // pred_region
      _
    $region21: #{lstm_module_forward.1} parent=1 // pred_fallthru
      _
    // Predicated region
    $region22: #{lstm_module_forward.1} parent=1 // pred_check
      _
    $region23: #{lstm_module_forward.1} parent=1 // pred_check_branch
      %38 = sbr.rel (0) target = $region25
    $region24: #{lstm_module_forward.1} parent=1 // pred_region
      _
    $region25: #{lstm_module_forward.1} parent=1 // pred_fallthru
      _
    // Predicated region
    $region26: #{lstm_module_forward.1} parent=1 // pred_check
      _
    $region27: #{lstm_module_forward.1} parent=1 // pred_check_branch
      %40 = sbr.rel (0) target = $region29
    $region28: #{lstm_module_forward.1} parent=1 // pred_region
      _
    $region29: #{lstm_module_forward.1} parent=1 // pred_fallthru
      _
    // Predicated region
    $region30: #{lstm_module_forward.1} parent=1 // pred_check
      _
    $region31: #{lstm_module_forward.1} parent=1 // pred_check_branch
      %42 = sbr.rel (0) target = $region33
    $region32: #{lstm_module_forward.1} parent=1 // pred_region
      _
    $region33: #{lstm_module_forward.1} parent=1 // pred_fallthru
      _
    // Predicated region
    $region34: #{lstm_module_forward.1} parent=1 // pred_check
      _
    $region35: #{lstm_module_forward.1} parent=1 // pred_check_branch
      %44 = sbr.rel (0) target = $region37
    $region36: #{lstm_module_forward.1} parent=1 // pred_region
      %46 = dma.done [#allocation4], 1024
    $region37: #{lstm_module_forward.1} parent=1 // pred_fallthru
      _
    %v48 = vld [vmem:[%s0] sm:$0xff]
    %v49 = vld [vmem:[%s0 + $0x8] sm:$0xff]
    %v50 = vld [vmem:[%s1] sm:$0xf]
    %v51 = vld [vmem:[%s2] sm:$0x1]
    %v53 = vperm.slane %v51, 0
    %vm55 = vcmask 31744
    %v57 = vsel %vm55, %v48, 0
    %v60 = vsel %vm55, %v49, 0
    %vm62 = vcmask 1043456
    %v64 = vsel %vm62, %v50, 0
    %66 = vmatpush.msra.mxu0 0.0
    %67 = vmatpush.msra.mxu0 0.0
    %68 = vmatpush.msra.mxu0 0.0
    %69 = vmatpush.msra.mxu0 0.0
    %70 = vmatpush.msra.mxu0 0.0
    %71 = vmatpush.msra.mxu0 0.0
    %72 = vmatpush.msra.mxu0 0.0
    %73 = vmatpush.msra.mxu0 0.0
    %74 = vmatpush.msra.mxu0 0.0
    %75 = vmatpush.msra.mxu0 0.0
    %76 = vmatpush.msra.mxu0 0.0
    %77 = vmatpush.msra.mxu0 0.0
    %78 = vmatpush.msra.mxu0 0.0
    %79 = vmatpush.msra.mxu0 0.0
    %80 = vmatpush.msra.mxu0 0.0
    %81 = vmatpush.msra.mxu0 %v64
    %82 = vmatmul.f32.gmra.mxu0 %v57
    %v83 = vpop.f32.mrf.mxu0
    %v84 = vadd.f32 %v53, %v83
    %85 = vmatmul.f32.gmra.mxu0 %v60
    %v86 = vpop.f32.mrf.mxu0
    %v87 = vadd.f32 %v53, %v86
    %88 = vdwg.mxu0
    %v89 = vld [vmem:[#allocation3] sm:$0xff]
    %v90 = vld [vmem:[#allocation3 + $0x8] sm:$0xff]
    %v91 = vld [vmem:[#allocation3 + $0x10] sm:$0xff]
    %v92 = vld [vmem:[#allocation3 + $0x18] sm:$0xff]
    %v93 = vld [vmem:[#allocation3 + $0x20] sm:$0xff]
    %v94 = vld [vmem:[#allocation3 + $0x28] sm:$0xff]
    %v95 = vld [vmem:[#allocation3 + $0x30] sm:$0xff]
    %v96 = vld [vmem:[#allocation3 + $0x38] sm:$0xff]
    %v97 = vld [vmem:[%s4] sm:$0xf]
    %v98 = vld [vmem:[%s4 + $0x4] sm:$0xf]
    %v99 = vld [vmem:[%s4 + $0x8] sm:$0xf]
    %v100 = vld [vmem:[%s4 + $0xc] sm:$0xf]
    %v101 = vld [vmem:[%s5] sm:$0x1]
    %v110 = vunpack.c.l.b16 %v89
    %v111 = vunpack.c.h.b16 %v89
    %v112 = vunpack.c.l.b16 %v90
    %v113 = vunpack.c.h.b16 %v90
    %v114 = vunpack.c.l.b16 %v91
    %v115 = vunpack.c.h.b16 %v91
    %v116 = vunpack.c.l.b16 %v92
    %v117 = vunpack.c.h.b16 %v92
    %v118 = vunpack.c.l.b16 %v93
    %v119 = vunpack.c.h.b16 %v93
    %v120 = vunpack.c.l.b16 %v94
    %v121 = vunpack.c.h.b16 %v94
    %v122 = vunpack.c.l.b16 %v95
    %v123 = vunpack.c.h.b16 %v95
    %v124 = vunpack.c.l.b16 %v96
    %v125 = vunpack.c.h.b16 %v96
    %v126 = vpack.c.b16 %v112, %v110
    %v127 = vpack.c.b16 %v113, %v111
    %v128 = vpack.c.b16 %v116, %v114
    %v129 = vpack.c.b16 %v117, %v115
    %v130 = vpack.c.b16 %v120, %v118
    %v131 = vpack.c.b16 %v121, %v119
    %v132 = vpack.c.b16 %v124, %v122
    %v133 = vpack.c.b16 %v125, %v123
    %vm142 = vcmask 523264
    %v144 = vsel %vm142, 0, 0
    %146 = vmatpush.bf16.msra.mxu0 0
    %147 = vmatpush.bf16.msra.mxu0 0
    %148 = vmatpush.bf16.msra.mxu0 0
    %149 = vmatpush.bf16.msra.mxu0 0
    %150 = vmatpush.bf16.msra.mxu0 %v132
    %151 = vmatpush.bf16.msra.mxu0 %v130
    %152 = vmatpush.bf16.msra.mxu0 %v128
    %153 = vmatpush.bf16.msra.mxu0 %v126
    %154 = vmatmul.bf16.gmra.mxu0 %v144
    %v155 = vpop.f32.mrf.mxu0
    %v156 = vadd.f32 0.0, %v155
    %v157 = vpop.f32.mrf.mxu0
    %158 = vdwg.mxu0
    %159 = vmatpush.bf16.msra.mxu0 0
    %160 = vmatpush.bf16.msra.mxu0 0
    %161 = vmatpush.bf16.msra.mxu0 0
    %162 = vmatpush.bf16.msra.mxu0 0
    %163 = vmatpush.bf16.msra.mxu0 %v133
    %164 = vmatpush.bf16.msra.mxu0 %v131
    %165 = vmatpush.bf16.msra.mxu0 %v129
    %166 = vmatpush.bf16.msra.mxu0 %v127
    %167 = vmatmul.bf16.gmra.mxu0 %v144
    %v168 = vpop.f32.mrf.mxu0
    %v169 = vadd.f32 0.0, %v168
    %v170 = vpop.f32.mrf.mxu0
    %171 = vdwg.mxu0
    %v172 = vadd.f32 %v84, %v156
    %v173 = vxor.u32 %v172, 2147483648
    %v174 = vmul.f32 %v173, 1.442695
    %v175 = vpow.pop %v174
    %v176 = vadd.f32 %v175, 1.0
    %v177 = vrcp.pop %v176
    %v178 = vmul.f32 %v176, %v177
    %v179 = vsub.f32 1.0, %v178
    %v180 = vmul.f32 %v177, %v179
    %v181 = vadd.f32 %v177, %v180
    %vm182 = vweird.f32 %v176
    %vm183 = vweird.f32 %v177
    %vm184 = vmor %vm182, %vm183
    %v185 = vsel %vm184, %v177, %v181
    %v186 = vand.u32 2147483647, %v176
    %vm187 = vcmp.eq.f32.partialorder %v186, 8.507059e+37
    %v188 = vand.u32 %v176, 2147483648
    %v189 = vor.u32 1.1754944e-38, %v188
    %v190 = vsel %vm187, %v189, %v185
    %v191 = vmul.f32 1.0, %v190
    %v192 = vtanh.pop %v172
    %v193 = vmul.f32 %v191, 0.0
    %195 = vrot.lane.b32.xlu0 %v192, 64
    %v196 = vpop.permute.xlu0 %195
    %v198 = vmul.f32 %v191, %v196
    %200 = vrot.lane.b32.xlu0 %v198, 32
    %v201 = vpop.permute.xlu0 %200
    %v203 = vadd.f32 %v193, %v201
    %v204 = vtanh.pop %v203
    %206 = vrot.lane.b32.xlu0 %v204, 64
    %v207 = vpop.permute.xlu0 %206
    %v209 = vmul.f32 %v191, %v207
    %v210 = vpack.c.bf16 %v209, %v209
    %212 = vrot.lane.b32.xlu0 %v210, 32
    %v213 = vpop.permute.xlu0 %212
    %v218 = vunpack.c.l.b16 %v97
    %v219 = vunpack.c.l.b16 %v98
    %v220 = vunpack.c.l.b16 %v99
    %v221 = vunpack.c.l.b16 %v100
    %v222 = vpack.c.b16 %v219, %v218
    %v223 = vpack.c.b16 %v221, %v220
    %vm226 = vcmask 261120
    %v228 = vsel %vm226, %v213, 0
    %230 = vmatpush.bf16.msra.mxu0 0
    %231 = vmatpush.bf16.msra.mxu0 0
    %232 = vmatpush.bf16.msra.mxu0 0
    %233 = vmatpush.bf16.msra.mxu0 0
    %234 = vmatpush.bf16.msra.mxu0 0
    %235 = vmatpush.bf16.msra.mxu0 0
    %236 = vmatpush.bf16.msra.mxu0 %v223
    %237 = vmatpush.bf16.msra.mxu0 %v222
    %238 = vmatmul.bf16.gmra.mxu0 %v228
    %v239 = vpop.f32.mrf.mxu0
    %v240 = vadd.f32 %v169, %v239
    %v241 = vpop.f32.mrf.mxu0
    %242 = vdwg.mxu0
    %v244 = vperm.slane %v101, 0
    %v246 = vadd.f32 %v240, %v244
    %v247 = vxor.u32 %v246, 2147483648
    %v248 = vmul.f32 %v247, 1.442695
    %v249 = vpow.pop %v248
    %v250 = vadd.f32 %v249, 1.0
    %v251 = vrcp.pop %v250
    %v252 = vmul.f32 %v250, %v251
    %v253 = vsub.f32 1.0, %v252
    %v254 = vmul.f32 %v251, %v253
    %v255 = vadd.f32 %v251, %v254
    %vm256 = vweird.f32 %v250
    %vm257 = vweird.f32 %v251
    %vm258 = vmor %vm256, %vm257
    %v259 = vsel %vm258, %v251, %v255
    %v260 = vand.u32 2147483647, %v250
    %vm261 = vcmp.eq.f32.partialorder %v260, 8.507059e+37
    %v262 = vand.u32 %v250, 2147483648
    %v263 = vor.u32 1.1754944e-38, %v262
    %v264 = vsel %vm261, %v263, %v259
    %v265 = vmul.f32 1.0, %v264
    %v266 = vtanh.pop %v246
    %v267 = vmul.f32 %v265, 0.0
    %269 = vrot.lane.b32.xlu0 %v266, 64
    %v270 = vpop.permute.xlu0 %269
    %v272 = vmul.f32 %v265, %v270
    %274 = vrot.lane.b32.xlu0 %v272, 32
    %v275 = vpop.permute.xlu0 %274
    %v277 = vadd.f32 %v267, %v275
    %v278 = vtanh.pop %v277
    %280 = vrot.lane.b32.xlu0 %v278, 64
    %v281 = vpop.permute.xlu0 %280
    %v283 = vmul.f32 %v265, %v281
    %285 = vrot.lane.b32.xlu0 %v209, 32
    %v286 = vpop.permute.xlu0 %285
    %289 = vrot.lane.b32.xlu0 %v283, 64
    %v290 = vpop.permute.xlu0 %289
    %v292 = vsel %vm226, %v286, %v290
    %v293 = vpack.c.bf16 %v292, %v292
    %v295 = vsel %vm142, %v293, 0
    %297 = vmatpush.bf16.msra.mxu0 0
    %298 = vmatpush.bf16.msra.mxu0 0
    %299 = vmatpush.bf16.msra.mxu0 0
    %300 = vmatpush.bf16.msra.mxu0 0
    %301 = vmatpush.bf16.msra.mxu0 %v132
    %302 = vmatpush.bf16.msra.mxu0 %v130
    %303 = vmatpush.bf16.msra.mxu0 %v128
    %304 = vmatpush.bf16.msra.mxu0 %v126
    %305 = vmatmul.bf16.gmra.mxu0 %v295
    %v306 = vpop.f32.mrf.mxu0
    %v307 = vadd.f32 0.0, %v306
    %v308 = vpop.f32.mrf.mxu0
    %309 = vdwg.mxu0
    %310 = vmatpush.bf16.msra.mxu0 0
    %311 = vmatpush.bf16.msra.mxu0 0
    %312 = vmatpush.bf16.msra.mxu0 0
    %313 = vmatpush.bf16.msra.mxu0 0
    %314 = vmatpush.bf16.msra.mxu0 %v133
    %315 = vmatpush.bf16.msra.mxu0 %v131
    %316 = vmatpush.bf16.msra.mxu0 %v129
    %317 = vmatpush.bf16.msra.mxu0 %v127
    %318 = vmatmul.bf16.gmra.mxu0 %v295
    %v319 = vpop.f32.mrf.mxu0
    %v320 = vadd.f32 0.0, %v319
    %v321 = vpop.f32.mrf.mxu0
    %322 = vdwg.mxu0
    %v324 = vrot.slane %v307, 6
    %v326 = vadd.f32 %v84, %v324
    %v327 = vxor.u32 %v326, 2147483648
    %v328 = vmul.f32 %v327, 1.442695
    %v329 = vpow.pop %v328
    %v330 = vadd.f32 %v329, 1.0
    %v331 = vrcp.pop %v330
    %v332 = vmul.f32 %v330, %v331
    %v333 = vsub.f32 1.0, %v332
    %v334 = vmul.f32 %v331, %v333
    %v335 = vadd.f32 %v331, %v334
    %vm336 = vweird.f32 %v330
    %vm337 = vweird.f32 %v331
    %vm338 = vmor %vm336, %vm337
    %v339 = vsel %vm338, %v331, %v335
    %v340 = vand.u32 2147483647, %v330
    %vm341 = vcmp.eq.f32.partialorder %v340, 8.507059e+37
    %v342 = vand.u32 %v330, 2147483648
    %v343 = vor.u32 1.1754944e-38, %v342
    %v344 = vsel %vm341, %v343, %v339
    %v345 = vmul.f32 1.0, %v344
    %v346 = vtanh.pop %v326
    %v348 = vrot.slane %v203, 6
    %v350 = vmul.f32 %v345, %v348
    %352 = vrot.lane.b32.xlu0 %v346, 64
    %v353 = vpop.permute.xlu0 %352
    %v355 = vmul.f32 %v345, %v353
    %357 = vrot.lane.b32.xlu0 %v355, 32
    %v358 = vpop.permute.xlu0 %357
    %v360 = vadd.f32 %v350, %v358
    %v361 = vtanh.pop %v360
    %363 = vrot.lane.b32.xlu0 %v361, 64
    %v364 = vpop.permute.xlu0 %363
    %v366 = vmul.f32 %v345, %v364
    %v367 = vpack.c.bf16 %v366, %v366
    %v369 = vrot.slane %v367, 1
    %370 = vrot.lane.b32.xlu0 %v369, 32
    %v371 = vpop.permute.xlu0 %370
    %v373 = vsel %vm226, %v371, 0
    %375 = vmatpush.bf16.msra.mxu0 0
    %376 = vmatpush.bf16.msra.mxu0 0
    %377 = vmatpush.bf16.msra.mxu0 0
    %378 = vmatpush.bf16.msra.mxu0 0
    %379 = vmatpush.bf16.msra.mxu0 0
    %380 = vmatpush.bf16.msra.mxu0 0
    %381 = vmatpush.bf16.msra.mxu0 %v223
    %382 = vmatpush.bf16.msra.mxu0 %v222
    %383 = vmatmul.bf16.gmra.mxu0 %v373
    %v384 = vpop.f32.mrf.mxu0
    %v385 = vadd.f32 %v320, %v384
    %v386 = vpop.f32.mrf.mxu0
    %387 = vdwg.mxu0
    %v388 = vadd.f32 %v385, %v244
    %v389 = vxor.u32 %v388, 2147483648
    %v390 = vmul.f32 %v389, 1.442695
    %v391 = vpow.pop %v390
    %v392 = vadd.f32 %v391, 1.0
    %v393 = vrcp.pop %v392
    %v394 = vmul.f32 %v392, %v393
    %v395 = vsub.f32 1.0, %v394
    %v396 = vmul.f32 %v393, %v395
    %v397 = vadd.f32 %v393, %v396
    %vm398 = vweird.f32 %v392
    %vm399 = vweird.f32 %v393
    %vm400 = vmor %vm398, %vm399
    %v401 = vsel %vm400, %v393, %v397
    %v402 = vand.u32 2147483647, %v392
    %vm403 = vcmp.eq.f32.partialorder %v402, 8.507059e+37
    %v404 = vand.u32 %v392, 2147483648
    %v405 = vor.u32 1.1754944e-38, %v404
    %v406 = vsel %vm403, %v405, %v401
    %v407 = vmul.f32 1.0, %v406
    %v408 = vtanh.pop %v388
    %v409 = vmul.f32 %v407, %v277
    %411 = vrot.lane.b32.xlu0 %v408, 64
    %v412 = vpop.permute.xlu0 %411
    %v414 = vmul.f32 %v407, %v412
    %416 = vrot.lane.b32.xlu0 %v414, 32
    %v417 = vpop.permute.xlu0 %416
    %v419 = vadd.f32 %v409, %v417
    %v420 = vtanh.pop %v419
    %422 = vrot.lane.b32.xlu0 %v420, 64
    %v423 = vpop.permute.xlu0 %422
    %v425 = vmul.f32 %v407, %v423
    %427 = vrot.lane.b32.xlu0 %v366, 32
    %v428 = vpop.permute.xlu0 %427
    %v431 = vrot.slane %v425, 6
    %432 = vrot.lane.b32.xlu0 %v431, 64
    %v433 = vpop.permute.xlu0 %432
    %v435 = vsel %vm226, %v428, %v433
    %v436 = vpack.c.bf16 %v435, %v435
    %v438 = vrot.slane %v436, 1
    %v440 = vsel %vm142, %v438, 0
    %442 = vmatpush.bf16.msra.mxu0 0
    %443 = vmatpush.bf16.msra.mxu0 0
    %444 = vmatpush.bf16.msra.mxu0 0
    %445 = vmatpush.bf16.msra.mxu0 0
    %446 = vmatpush.bf16.msra.mxu0 %v132
    %447 = vmatpush.bf16.msra.mxu0 %v130
    %448 = vmatpush.bf16.msra.mxu0 %v128
    %449 = vmatpush.bf16.msra.mxu0 %v126
    %450 = vmatmul.bf16.gmra.mxu0 %v440
    %v451 = vpop.f32.mrf.mxu0
    %v452 = vadd.f32 0.0, %v451
    %v453 = vpop.f32.mrf.mxu0
    %454 = vdwg.mxu0
    %455 = vmatpush.bf16.msra.mxu0 0
    %456 = vmatpush.bf16.msra.mxu0 0
    %457 = vmatpush.bf16.msra.mxu0 0
    %458 = vmatpush.bf16.msra.mxu0 0
    %459 = vmatpush.bf16.msra.mxu0 %v133
    %460 = vmatpush.bf16.msra.mxu0 %v131
    %461 = vmatpush.bf16.msra.mxu0 %v129
    %462 = vmatpush.bf16.msra.mxu0 %v127
    %463 = vmatmul.bf16.gmra.mxu0 %v440
    %v464 = vpop.f32.mrf.mxu0
    %v465 = vadd.f32 0.0, %v464
    %v466 = vpop.f32.mrf.mxu0
    %467 = vdwg.mxu0
    %v469 = vrot.slane %v452, 4
    %v471 = vadd.f32 %v84, %v469
    %v472 = vxor.u32 %v471, 2147483648
    %v473 = vmul.f32 %v472, 1.442695
    %v474 = vpow.pop %v473
    %v475 = vadd.f32 %v474, 1.0
    %v476 = vrcp.pop %v475
    %v477 = vmul.f32 %v475, %v476
    %v478 = vsub.f32 1.0, %v477
    %v479 = vmul.f32 %v476, %v478
    %v480 = vadd.f32 %v476, %v479
    %vm481 = vweird.f32 %v475
    %vm482 = vweird.f32 %v476
    %vm483 = vmor %vm481, %vm482
    %v484 = vsel %vm483, %v476, %v480
    %v485 = vand.u32 2147483647, %v475
    %vm486 = vcmp.eq.f32.partialorder %v485, 8.507059e+37
    %v487 = vand.u32 %v475, 2147483648
    %v488 = vor.u32 1.1754944e-38, %v487
    %v489 = vsel %vm486, %v488, %v484
    %v490 = vmul.f32 1.0, %v489
    %v491 = vtanh.pop %v471
    %v493 = vrot.slane %v360, 6
    %v495 = vmul.f32 %v490, %v493
    %497 = vrot.lane.b32.xlu0 %v491, 64
    %v498 = vpop.permute.xlu0 %497
    %v500 = vmul.f32 %v490, %v498
    %502 = vrot.lane.b32.xlu0 %v500, 32
    %v503 = vpop.permute.xlu0 %502
    %v505 = vadd.f32 %v495, %v503
    %v506 = vtanh.pop %v505
    %508 = vrot.lane.b32.xlu0 %v506, 64
    %v509 = vpop.permute.xlu0 %508
    %v511 = vmul.f32 %v490, %v509
    %v512 = vpack.c.bf16 %v511, %v511
    %v514 = vrot.slane %v512, 2
    %515 = vrot.lane.b32.xlu0 %v514, 32
    %v516 = vpop.permute.xlu0 %515
    %v518 = vsel %vm226, %v516, 0
    %520 = vmatpush.bf16.msra.mxu0 0
    %521 = vmatpush.bf16.msra.mxu0 0
    %522 = vmatpush.bf16.msra.mxu0 0
    %523 = vmatpush.bf16.msra.mxu0 0
    %524 = vmatpush.bf16.msra.mxu0 0
    %525 = vmatpush.bf16.msra.mxu0 0
    %526 = vmatpush.bf16.msra.mxu0 %v223
    %527 = vmatpush.bf16.msra.mxu0 %v222
    %528 = vmatmul.bf16.gmra.mxu0 %v518
    %v529 = vpop.f32.mrf.mxu0
    %v530 = vadd.f32 %v465, %v529
    %v531 = vpop.f32.mrf.mxu0
    %532 = vdwg.mxu0
    %v533 = vadd.f32 %v530, %v244
    %v534 = vxor.u32 %v533, 2147483648
    %v535 = vmul.f32 %v534, 1.442695
    %v536 = vpow.pop %v535
    %v537 = vadd.f32 %v536, 1.0
    %v538 = vrcp.pop %v537
    %v539 = vmul.f32 %v537, %v538
    %v540 = vsub.f32 1.0, %v539
    %v541 = vmul.f32 %v538, %v540
    %v542 = vadd.f32 %v538, %v541
    %vm543 = vweird.f32 %v537
    %vm544 = vweird.f32 %v538
    %vm545 = vmor %vm543, %vm544
    %v546 = vsel %vm545, %v538, %v542
    %v547 = vand.u32 2147483647, %v537
    %vm548 = vcmp.eq.f32.partialorder %v547, 8.507059e+37
    %v549 = vand.u32 %v537, 2147483648
    %v550 = vor.u32 1.1754944e-38, %v549
    %v551 = vsel %vm548, %v550, %v546
    %v552 = vmul.f32 1.0, %v551
    %v553 = vtanh.pop %v533
    %v554 = vmul.f32 %v552, %v419
    %556 = vrot.lane.b32.xlu0 %v553, 64
    %v557 = vpop.permute.xlu0 %556
    %v559 = vmul.f32 %v552, %v557
    %561 = vrot.lane.b32.xlu0 %v559, 32
    %v562 = vpop.permute.xlu0 %561
    %v564 = vadd.f32 %v554, %v562
    %v565 = vtanh.pop %v564
    %567 = vrot.lane.b32.xlu0 %v565, 64
    %v568 = vpop.permute.xlu0 %567
    %v570 = vmul.f32 %v552, %v568
    %572 = vrot.lane.b32.xlu0 %v511, 32
    %v573 = vpop.permute.xlu0 %572
    %v576 = vrot.slane %v570, 4
    %577 = vrot.lane.b32.xlu0 %v576, 64
    %v578 = vpop.permute.xlu0 %577
    %v580 = vsel %vm226, %v573, %v578
    %v581 = vpack.c.bf16 %v580, %v580
    %v583 = vrot.slane %v581, 2
    %v585 = vsel %vm142, %v583, 0
    %587 = vmatpush.bf16.msra.mxu0 0
    %588 = vmatpush.bf16.msra.mxu0 0
    %589 = vmatpush.bf16.msra.mxu0 0
    %590 = vmatpush.bf16.msra.mxu0 0
    %591 = vmatpush.bf16.msra.mxu0 %v132
    %592 = vmatpush.bf16.msra.mxu0 %v130
    %593 = vmatpush.bf16.msra.mxu0 %v128
    %594 = vmatpush.bf16.msra.mxu0 %v126
    %595 = vmatmul.bf16.gmra.mxu0 %v585
    %v596 = vpop.f32.mrf.mxu0
    %v597 = vadd.f32 0.0, %v596
    %v598 = vpop.f32.mrf.mxu0
    %599 = vdwg.mxu0
    %600 = vmatpush.bf16.msra.mxu0 0
    %601 = vmatpush.bf16.msra.mxu0 0
    %602 = vmatpush.bf16.msra.mxu0 0
    %603 = vmatpush.bf16.msra.mxu0 0
    %604 = vmatpush.bf16.msra.mxu0 %v133
    %605 = vmatpush.bf16.msra.mxu0 %v131
    %606 = vmatpush.bf16.msra.mxu0 %v129
    %607 = vmatpush.bf16.msra.mxu0 %v127
    %608 = vmatmul.bf16.gmra.mxu0 %v585
    %v609 = vpop.f32.mrf.mxu0
    %v610 = vadd.f32 0.0, %v609
    %v611 = vpop.f32.mrf.mxu0
    %612 = vdwg.mxu0
    %v614 = vrot.slane %v597, 2
    %v616 = vadd.f32 %v84, %v614
    %v617 = vxor.u32 %v616, 2147483648
    %v618 = vmul.f32 %v617, 1.442695
    %v619 = vpow.pop %v618
    %v620 = vadd.f32 %v619, 1.0
    %v621 = vrcp.pop %v620
    %v622 = vmul.f32 %v620, %v621
    %v623 = vsub.f32 1.0, %v622
    %v624 = vmul.f32 %v621, %v623
    %v625 = vadd.f32 %v621, %v624
    %vm626 = vweird.f32 %v620
    %vm627 = vweird.f32 %v621
    %vm628 = vmor %vm626, %vm627
    %v629 = vsel %vm628, %v621, %v625
    %v630 = vand.u32 2147483647, %v620
    %vm631 = vcmp.eq.f32.partialorder %v630, 8.507059e+37
    %v632 = vand.u32 %v620, 2147483648
    %v633 = vor.u32 1.1754944e-38, %v632
    %v634 = vsel %vm631, %v633, %v629
    %v635 = vmul.f32 1.0, %v634
    %v636 = vtanh.pop %v616
    %v638 = vrot.slane %v505, 6
    %v640 = vmul.f32 %v635, %v638
    %642 = vrot.lane.b32.xlu0 %v636, 64
    %v643 = vpop.permute.xlu0 %642
    %v645 = vmul.f32 %v635, %v643
    %647 = vrot.lane.b32.xlu0 %v645, 32
    %v648 = vpop.permute.xlu0 %647
    %v650 = vadd.f32 %v640, %v648
    %v651 = vtanh.pop %v650
    %653 = vrot.lane.b32.xlu0 %v651, 64
    %v654 = vpop.permute.xlu0 %653
    %v656 = vmul.f32 %v635, %v654
    %v657 = vpack.c.bf16 %v656, %v656
    %v659 = vrot.slane %v657, 3
    %660 = vrot.lane.b32.xlu0 %v659, 32
    %v661 = vpop.permute.xlu0 %660
    %v663 = vsel %vm226, %v661, 0
    %665 = vmatpush.bf16.msra.mxu0 0
    %666 = vmatpush.bf16.msra.mxu0 0
    %667 = vmatpush.bf16.msra.mxu0 0
    %668 = vmatpush.bf16.msra.mxu0 0
    %669 = vmatpush.bf16.msra.mxu0 0
    %670 = vmatpush.bf16.msra.mxu0 0
    %671 = vmatpush.bf16.msra.mxu0 %v223
    %672 = vmatpush.bf16.msra.mxu0 %v222
    %673 = vmatmul.bf16.gmra.mxu0 %v663
    %v674 = vpop.f32.mrf.mxu0
    %v675 = vadd.f32 %v610, %v674
    %v676 = vpop.f32.mrf.mxu0
    %677 = vdwg.mxu0
    %v678 = vadd.f32 %v675, %v244
    %v679 = vxor.u32 %v678, 2147483648
    %v680 = vmul.f32 %v679, 1.442695
    %v681 = vpow.pop %v680
    %v682 = vadd.f32 %v681, 1.0
    %v683 = vrcp.pop %v682
    %v684 = vmul.f32 %v682, %v683
    %v685 = vsub.f32 1.0, %v684
    %v686 = vmul.f32 %v683, %v685
    %v687 = vadd.f32 %v683, %v686
    %vm688 = vweird.f32 %v682
    %vm689 = vweird.f32 %v683
    %vm690 = vmor %vm688, %vm689
    %v691 = vsel %vm690, %v683, %v687
    %v692 = vand.u32 2147483647, %v682
    %vm693 = vcmp.eq.f32.partialorder %v692, 8.507059e+37
    %v694 = vand.u32 %v682, 2147483648
    %v695 = vor.u32 1.1754944e-38, %v694
    %v696 = vsel %vm693, %v695, %v691
    %v697 = vmul.f32 1.0, %v696
    %v698 = vtanh.pop %v678
    %v699 = vmul.f32 %v697, %v564
    %701 = vrot.lane.b32.xlu0 %v698, 64
    %v702 = vpop.permute.xlu0 %701
    %v704 = vmul.f32 %v697, %v702
    %706 = vrot.lane.b32.xlu0 %v704, 32
    %v707 = vpop.permute.xlu0 %706
    %v709 = vadd.f32 %v699, %v707
    %v710 = vtanh.pop %v709
    %712 = vrot.lane.b32.xlu0 %v710, 64
    %v713 = vpop.permute.xlu0 %712
    %v715 = vmul.f32 %v697, %v713
    %717 = vrot.lane.b32.xlu0 %v656, 32
    %v718 = vpop.permute.xlu0 %717
    %v721 = vrot.slane %v715, 2
    %722 = vrot.lane.b32.xlu0 %v721, 64
    %v723 = vpop.permute.xlu0 %722
    %v725 = vsel %vm226, %v718, %v723
    %v726 = vpack.c.bf16 %v725, %v725
    %v728 = vrot.slane %v726, 3
    %v730 = vsel %vm142, %v728, 0
    %732 = vmatpush.bf16.msra.mxu0 0
    %733 = vmatpush.bf16.msra.mxu0 0
    %734 = vmatpush.bf16.msra.mxu0 0
    %735 = vmatpush.bf16.msra.mxu0 0
    %736 = vmatpush.bf16.msra.mxu0 %v132
    %737 = vmatpush.bf16.msra.mxu0 %v130
    %738 = vmatpush.bf16.msra.mxu0 %v128
    %739 = vmatpush.bf16.msra.mxu0 %v126
    %740 = vmatmul.bf16.gmra.mxu0 %v730
    %v741 = vpop.f32.mrf.mxu0
    %v742 = vadd.f32 0.0, %v741
    %v743 = vpop.f32.mrf.mxu0
    %744 = vdwg.mxu0
    %745 = vmatpush.bf16.msra.mxu0 0
    %746 = vmatpush.bf16.msra.mxu0 0
    %747 = vmatpush.bf16.msra.mxu0 0
    %748 = vmatpush.bf16.msra.mxu0 0
    %749 = vmatpush.bf16.msra.mxu0 %v133
    %750 = vmatpush.bf16.msra.mxu0 %v131
    %751 = vmatpush.bf16.msra.mxu0 %v129
    %752 = vmatpush.bf16.msra.mxu0 %v127
    %753 = vmatmul.bf16.gmra.mxu0 %v730
    %v754 = vpop.f32.mrf.mxu0
    %v755 = vadd.f32 0.0, %v754
    %v756 = vpop.f32.mrf.mxu0
    %757 = vdwg.mxu0
    %v758 = vadd.f32 %v87, %v742
    %v759 = vxor.u32 %v758, 2147483648
    %v760 = vmul.f32 %v759, 1.442695
    %v761 = vpow.pop %v760
    %v762 = vadd.f32 %v761, 1.0
    %v763 = vrcp.pop %v762
    %v764 = vmul.f32 %v762, %v763
    %v765 = vsub.f32 1.0, %v764
    %v766 = vmul.f32 %v763, %v765
    %v767 = vadd.f32 %v763, %v766
    %vm768 = vweird.f32 %v762
    %vm769 = vweird.f32 %v763
    %vm770 = vmor %vm768, %vm769
    %v771 = vsel %vm770, %v763, %v767
    %v772 = vand.u32 2147483647, %v762
    %vm773 = vcmp.eq.f32.partialorder %v772, 8.507059e+37
    %v774 = vand.u32 %v762, 2147483648
    %v775 = vor.u32 1.1754944e-38, %v774
    %v776 = vsel %vm773, %v775, %v771
    %v777 = vmul.f32 1.0, %v776
    %v778 = vtanh.pop %v758
    %v780 = vrot.slane %v650, 6
    %v782 = vmul.f32 %v777, %v780
    %784 = vrot.lane.b32.xlu0 %v778, 64
    %v785 = vpop.permute.xlu0 %784
    %v787 = vmul.f32 %v777, %v785
    %789 = vrot.lane.b32.xlu0 %v787, 32
    %v790 = vpop.permute.xlu0 %789
    %v792 = vadd.f32 %v782, %v790
    %v793 = vtanh.pop %v792
    %795 = vrot.lane.b32.xlu0 %v793, 64
    %v796 = vpop.permute.xlu0 %795
    %v798 = vmul.f32 %v777, %v796
    %v799 = vpack.c.bf16 %v798, %v798
    %801 = vrot.lane.b32.xlu0 %v799, 32
    %v802 = vpop.permute.xlu0 %801
    %v804 = vsel %vm226, %v802, 0
    %806 = vmatpush.bf16.msra.mxu0 0
    %807 = vmatpush.bf16.msra.mxu0 0
    %808 = vmatpush.bf16.msra.mxu0 0
    %809 = vmatpush.bf16.msra.mxu0 0
    %810 = vmatpush.bf16.msra.mxu0 0
    %811 = vmatpush.bf16.msra.mxu0 0
    %812 = vmatpush.bf16.msra.mxu0 %v223
    %813 = vmatpush.bf16.msra.mxu0 %v222
    %814 = vmatmul.bf16.gmra.mxu0 %v804
    %v815 = vpop.f32.mrf.mxu0
    %v816 = vadd.f32 %v755, %v815
    %v817 = vpop.f32.mrf.mxu0
    %818 = vdwg.mxu0
    %v819 = vadd.f32 %v816, %v244
    %v820 = vxor.u32 %v819, 2147483648
    %v821 = vmul.f32 %v820, 1.442695
    %v822 = vpow.pop %v821
    %v823 = vadd.f32 %v822, 1.0
    %v824 = vrcp.pop %v823
    %v825 = vmul.f32 %v823, %v824
    %v826 = vsub.f32 1.0, %v825
    %v827 = vmul.f32 %v824, %v826
    %v828 = vadd.f32 %v824, %v827
    %vm829 = vweird.f32 %v823
    %vm830 = vweird.f32 %v824
    %vm831 = vmor %vm829, %vm830
    %v832 = vsel %vm831, %v824, %v828
    %v833 = vand.u32 2147483647, %v823
    %vm834 = vcmp.eq.f32.partialorder %v833, 8.507059e+37
    %v835 = vand.u32 %v823, 2147483648
    %v836 = vor.u32 1.1754944e-38, %v835
    %v837 = vsel %vm834, %v836, %v832
    %v838 = vmul.f32 1.0, %v837
    %v839 = vtanh.pop %v819
    %v840 = vmul.f32 %v838, %v709
    %842 = vrot.lane.b32.xlu0 %v839, 64
    %v843 = vpop.permute.xlu0 %842
    %v845 = vmul.f32 %v838, %v843
    %847 = vrot.lane.b32.xlu0 %v845, 32
    %v848 = vpop.permute.xlu0 %847
    %v850 = vadd.f32 %v840, %v848
    %v851 = vtanh.pop %v850
    %853 = vrot.lane.b32.xlu0 %v851, 64
    %v854 = vpop.permute.xlu0 %853
    %v856 = vmul.f32 %v838, %v854
    %858 = vrot.lane.b32.xlu0 %v798, 32
    %v859 = vpop.permute.xlu0 %858
    %862 = vrot.lane.b32.xlu0 %v856, 64
    %v863 = vpop.permute.xlu0 %862
    %v865 = vsel %vm226, %v859, %v863
    %v866 = vpack.c.bf16 %v865, %v865
    %v868 = vsel %vm142, %v866, 0
    %870 = vmatpush.bf16.msra.mxu0 0
    %871 = vmatpush.bf16.msra.mxu0 0
    %872 = vmatpush.bf16.msra.mxu0 0
    %873 = vmatpush.bf16.msra.mxu0 0
    %874 = vmatpush.bf16.msra.mxu0 %v132
    %875 = vmatpush.bf16.msra.mxu0 %v130
    %876 = vmatpush.bf16.msra.mxu0 %v128
    %877 = vmatpush.bf16.msra.mxu0 %v126
    %878 = vmatmul.bf16.gmra.mxu0 %v868
    %v879 = vpop.f32.mrf.mxu0
    %v880 = vadd.f32 0.0, %v879
    %v881 = vpop.f32.mrf.mxu0
    %882 = vdwg.mxu0
    %883 = vmatpush.bf16.msra.mxu0 0
    %884 = vmatpush.bf16.msra.mxu0 0
    %885 = vmatpush.bf16.msra.mxu0 0
    %886 = vmatpush.bf16.msra.mxu0 0
    %887 = vmatpush.bf16.msra.mxu0 %v133
    %888 = vmatpush.bf16.msra.mxu0 %v131
    %889 = vmatpush.bf16.msra.mxu0 %v129
    %890 = vmatpush.bf16.msra.mxu0 %v127
    %891 = vmatmul.bf16.gmra.mxu0 %v868
    %v892 = vpop.f32.mrf.mxu0
    %v893 = vadd.f32 0.0, %v892
    %v894 = vpop.f32.mrf.mxu0
    %895 = vdwg.mxu0
    %v897 = vrot.slane %v880, 6
    %v899 = vadd.f32 %v87, %v897
    %v900 = vxor.u32 %v899, 2147483648
    %v901 = vmul.f32 %v900, 1.442695
    %v902 = vpow.pop %v901
    %v903 = vadd.f32 %v902, 1.0
    %v904 = vrcp.pop %v903
    %v905 = vmul.f32 %v903, %v904
    %v906 = vsub.f32 1.0, %v905
    %v907 = vmul.f32 %v904, %v906
    %v908 = vadd.f32 %v904, %v907
    %vm909 = vweird.f32 %v903
    %vm910 = vweird.f32 %v904
    %vm911 = vmor %vm909, %vm910
    %v912 = vsel %vm911, %v904, %v908
    %v913 = vand.u32 2147483647, %v903
    %vm914 = vcmp.eq.f32.partialorder %v913, 8.507059e+37
    %v915 = vand.u32 %v903, 2147483648
    %v916 = vor.u32 1.1754944e-38, %v915
    %v917 = vsel %vm914, %v916, %v912
    %v918 = vmul.f32 1.0, %v917
    %v919 = vtanh.pop %v899
    %v921 = vrot.slane %v792, 6
    %v923 = vmul.f32 %v918, %v921
    %925 = vrot.lane.b32.xlu0 %v919, 64
    %v926 = vpop.permute.xlu0 %925
    %v928 = vmul.f32 %v918, %v926
    %930 = vrot.lane.b32.xlu0 %v928, 32
    %v931 = vpop.permute.xlu0 %930
    %v933 = vadd.f32 %v923, %v931
    %v934 = vtanh.pop %v933
    %936 = vrot.lane.b32.xlu0 %v934, 64
    %v937 = vpop.permute.xlu0 %936
    %v939 = vmul.f32 %v918, %v937
    %v940 = vpack.c.bf16 %v939, %v939
    %v942 = vrot.slane %v940, 1
    %943 = vrot.lane.b32.xlu0 %v942, 32
    %v944 = vpop.permute.xlu0 %943
    %v946 = vsel %vm226, %v944, 0
    %948 = vmatpush.bf16.msra.mxu0 0
    %949 = vmatpush.bf16.msra.mxu0 0
    %950 = vmatpush.bf16.msra.mxu0 0
    %951 = vmatpush.bf16.msra.mxu0 0
    %952 = vmatpush.bf16.msra.mxu0 0
    %953 = vmatpush.bf16.msra.mxu0 0
    %954 = vmatpush.bf16.msra.mxu0 %v223
    %955 = vmatpush.bf16.msra.mxu0 %v222
    %956 = vmatmul.bf16.gmra.mxu0 %v946
    %v957 = vpop.f32.mrf.mxu0
    %v958 = vadd.f32 %v893, %v957
    %v959 = vpop.f32.mrf.mxu0
    %960 = vdwg.mxu0
    %v961 = vadd.f32 %v958, %v244
    %v962 = vxor.u32 %v961, 2147483648
    %v963 = vmul.f32 %v962, 1.442695
    %v964 = vpow.pop %v963
    %v965 = vadd.f32 %v964, 1.0
    %v966 = vrcp.pop %v965
    %v967 = vmul.f32 %v965, %v966
    %v968 = vsub.f32 1.0, %v967
    %v969 = vmul.f32 %v966, %v968
    %v970 = vadd.f32 %v966, %v969
    %vm971 = vweird.f32 %v965
    %vm972 = vweird.f32 %v966
    %vm973 = vmor %vm971, %vm972
    %v974 = vsel %vm973, %v966, %v970
    %v975 = vand.u32 2147483647, %v965
    %vm976 = vcmp.eq.f32.partialorder %v975, 8.507059e+37
    %v977 = vand.u32 %v965, 2147483648
    %v978 = vor.u32 1.1754944e-38, %v977
    %v979 = vsel %vm976, %v978, %v974
    %v980 = vmul.f32 1.0, %v979
    %v981 = vtanh.pop %v961
    %v982 = vmul.f32 %v980, %v850
    %984 = vrot.lane.b32.xlu0 %v981, 64
    %v985 = vpop.permute.xlu0 %984
    %v987 = vmul.f32 %v980, %v985
    %989 = vrot.lane.b32.xlu0 %v987, 32
    %v990 = vpop.permute.xlu0 %989
    %v992 = vadd.f32 %v982, %v990
    %v993 = vtanh.pop %v992
    %995 = vrot.lane.b32.xlu0 %v993, 64
    %v996 = vpop.permute.xlu0 %995
    %v998 = vmul.f32 %v980, %v996
    %1000 = vrot.lane.b32.xlu0 %v939, 32
    %v1001 = vpop.permute.xlu0 %1000
    %v1004 = vrot.slane %v998, 6
    %1005 = vrot.lane.b32.xlu0 %v1004, 64
    %v1006 = vpop.permute.xlu0 %1005
    %v1008 = vsel %vm226, %v1001, %v1006
    %v1009 = vpack.c.bf16 %v1008, %v1008
    %v1011 = vrot.slane %v1009, 1
    %v1013 = vsel %vm142, %v1011, 0
    %1015 = vmatpush.bf16.msra.mxu0 0
    %1016 = vmatpush.bf16.msra.mxu0 0
    %1017 = vmatpush.bf16.msra.mxu0 0
    %1018 = vmatpush.bf16.msra.mxu0 0
    %1019 = vmatpush.bf16.msra.mxu0 %v132
    %1020 = vmatpush.bf16.msra.mxu0 %v130
    %1021 = vmatpush.bf16.msra.mxu0 %v128
    %1022 = vmatpush.bf16.msra.mxu0 %v126
    %1023 = vmatmul.bf16.gmra.mxu0 %v1013
    %v1024 = vpop.f32.mrf.mxu0
    %v1025 = vadd.f32 0.0, %v1024
    %v1026 = vpop.f32.mrf.mxu0
    %1027 = vdwg.mxu0
    %1028 = vmatpush.bf16.msra.mxu0 0
    %1029 = vmatpush.bf16.msra.mxu0 0
    %1030 = vmatpush.bf16.msra.mxu0 0
    %1031 = vmatpush.bf16.msra.mxu0 0
    %1032 = vmatpush.bf16.msra.mxu0 %v133
    %1033 = vmatpush.bf16.msra.mxu0 %v131
    %1034 = vmatpush.bf16.msra.mxu0 %v129
    %1035 = vmatpush.bf16.msra.mxu0 %v127
    %1036 = vmatmul.bf16.gmra.mxu0 %v1013
    %v1037 = vpop.f32.mrf.mxu0
    %v1038 = vadd.f32 0.0, %v1037
    %v1039 = vpop.f32.mrf.mxu0
    %1040 = vdwg.mxu0
    %v1042 = vrot.slane %v1025, 4
    %v1044 = vadd.f32 %v87, %v1042
    %v1045 = vxor.u32 %v1044, 2147483648
    %v1046 = vmul.f32 %v1045, 1.442695
    %v1047 = vpow.pop %v1046
    %v1048 = vadd.f32 %v1047, 1.0
    %v1049 = vrcp.pop %v1048
    %v1050 = vmul.f32 %v1048, %v1049
    %v1051 = vsub.f32 1.0, %v1050
    %v1052 = vmul.f32 %v1049, %v1051
    %v1053 = vadd.f32 %v1049, %v1052
    %vm1054 = vweird.f32 %v1048
    %vm1055 = vweird.f32 %v1049
    %vm1056 = vmor %vm1054, %vm1055
    %v1057 = vsel %vm1056, %v1049, %v1053
    %v1058 = vand.u32 2147483647, %v1048
    %vm1059 = vcmp.eq.f32.partialorder %v1058, 8.507059e+37
    %v1060 = vand.u32 %v1048, 2147483648
    %v1061 = vor.u32 1.1754944e-38, %v1060
    %v1062 = vsel %vm1059, %v1061, %v1057
    %v1063 = vmul.f32 1.0, %v1062
    %v1064 = vtanh.pop %v1044
    %v1066 = vrot.slane %v933, 6
    %v1068 = vmul.f32 %v1063, %v1066
    %1070 = vrot.lane.b32.xlu0 %v1064, 64
    %v1071 = vpop.permute.xlu0 %1070
    %v1073 = vmul.f32 %v1063, %v1071
    %1075 = vrot.lane.b32.xlu0 %v1073, 32
    %v1076 = vpop.permute.xlu0 %1075
    %v1078 = vadd.f32 %v1068, %v1076
    %v1079 = vtanh.pop %v1078
    %1081 = vrot.lane.b32.xlu0 %v1079, 64
    %v1082 = vpop.permute.xlu0 %1081
    %v1084 = vmul.f32 %v1063, %v1082
    %v1085 = vpack.c.bf16 %v1084, %v1084
    %v1087 = vrot.slane %v1085, 2
    %1088 = vrot.lane.b32.xlu0 %v1087, 32
    %v1089 = vpop.permute.xlu0 %1088
    %v1091 = vsel %vm226, %v1089, 0
    %1093 = vmatpush.bf16.msra.mxu0 0
    %1094 = vmatpush.bf16.msra.mxu0 0
    %1095 = vmatpush.bf16.msra.mxu0 0
    %1096 = vmatpush.bf16.msra.mxu0 0
    %1097 = vmatpush.bf16.msra.mxu0 0
    %1098 = vmatpush.bf16.msra.mxu0 0
    %1099 = vmatpush.bf16.msra.mxu0 %v223
    %1100 = vmatpush.bf16.msra.mxu0 %v222
    %1101 = vmatmul.bf16.gmra.mxu0 %v1091
    %v1102 = vpop.f32.mrf.mxu0
    %v1103 = vadd.f32 %v1038, %v1102
    %v1104 = vpop.f32.mrf.mxu0
    %1105 = vdwg.mxu0
    %v1106 = vadd.f32 %v1103, %v244
    %v1107 = vxor.u32 %v1106, 2147483648
    %v1108 = vmul.f32 %v1107, 1.442695
    %v1109 = vpow.pop %v1108
    %v1110 = vadd.f32 %v1109, 1.0
    %v1111 = vrcp.pop %v1110
    %v1112 = vmul.f32 %v1110, %v1111
    %v1113 = vsub.f32 1.0, %v1112
    %v1114 = vmul.f32 %v1111, %v1113
    %v1115 = vadd.f32 %v1111, %v1114
    %vm1116 = vweird.f32 %v1110
    %vm1117 = vweird.f32 %v1111
    %vm1118 = vmor %vm1116, %vm1117
    %v1119 = vsel %vm1118, %v1111, %v1115
    %v1120 = vand.u32 2147483647, %v1110
    %vm1121 = vcmp.eq.f32.partialorder %v1120, 8.507059e+37
    %v1122 = vand.u32 %v1110, 2147483648
    %v1123 = vor.u32 1.1754944e-38, %v1122
    %v1124 = vsel %vm1121, %v1123, %v1119
    %v1125 = vmul.f32 1.0, %v1124
    %v1126 = vtanh.pop %v1106
    %v1127 = vmul.f32 %v1125, %v992
    %1129 = vrot.lane.b32.xlu0 %v1126, 64
    %v1130 = vpop.permute.xlu0 %1129
    %v1132 = vmul.f32 %v1125, %v1130
    %1134 = vrot.lane.b32.xlu0 %v1132, 32
    %v1135 = vpop.permute.xlu0 %1134
    %v1137 = vadd.f32 %v1127, %v1135
    %v1138 = vtanh.pop %v1137
    %1140 = vrot.lane.b32.xlu0 %v1138, 64
    %v1141 = vpop.permute.xlu0 %1140
    %v1143 = vmul.f32 %v1125, %v1141
    %1145 = vrot.lane.b32.xlu0 %v1084, 32
    %v1146 = vpop.permute.xlu0 %1145
    %v1149 = vrot.slane %v1143, 4
    %1150 = vrot.lane.b32.xlu0 %v1149, 64
    %v1151 = vpop.permute.xlu0 %1150
    %v1153 = vsel %vm226, %v1146, %v1151
    %v1154 = vpack.c.bf16 %v1153, %v1153
    %v1156 = vrot.slane %v1154, 2
    %v1158 = vsel %vm142, %v1156, 0
    %1160 = vmatpush.bf16.msra.mxu0 0
    %1161 = vmatpush.bf16.msra.mxu0 0
    %1162 = vmatpush.bf16.msra.mxu0 0
    %1163 = vmatpush.bf16.msra.mxu0 0
    %1164 = vmatpush.bf16.msra.mxu0 %v132
    %1165 = vmatpush.bf16.msra.mxu0 %v130
    %1166 = vmatpush.bf16.msra.mxu0 %v128
    %1167 = vmatpush.bf16.msra.mxu0 %v126
    %1168 = vmatmul.bf16.gmra.mxu0 %v1158
    %v1169 = vpop.f32.mrf.mxu0
    %v1170 = vadd.f32 0.0, %v1169
    %v1171 = vpop.f32.mrf.mxu0
    %1172 = vdwg.mxu0
    %1173 = vmatpush.bf16.msra.mxu0 0
    %1174 = vmatpush.bf16.msra.mxu0 0
    %1175 = vmatpush.bf16.msra.mxu0 0
    %1176 = vmatpush.bf16.msra.mxu0 0
    %1177 = vmatpush.bf16.msra.mxu0 %v133
    %1178 = vmatpush.bf16.msra.mxu0 %v131
    %1179 = vmatpush.bf16.msra.mxu0 %v129
    %1180 = vmatpush.bf16.msra.mxu0 %v127
    %1181 = vmatmul.bf16.gmra.mxu0 %v1158
    %v1182 = vpop.f32.mrf.mxu0
    %v1183 = vadd.f32 0.0, %v1182
    %v1184 = vpop.f32.mrf.mxu0
    %1185 = vdwg.mxu0
    %v1187 = vrot.slane %v1170, 2
    %v1189 = vadd.f32 %v87, %v1187
    %v1190 = vxor.u32 %v1189, 2147483648
    %v1191 = vmul.f32 %v1190, 1.442695
    %v1192 = vpow.pop %v1191
    %v1193 = vadd.f32 %v1192, 1.0
    %v1194 = vrcp.pop %v1193
    %v1195 = vmul.f32 %v1193, %v1194
    %v1196 = vsub.f32 1.0, %v1195
    %v1197 = vmul.f32 %v1194, %v1196
    %v1198 = vadd.f32 %v1194, %v1197
    %vm1199 = vweird.f32 %v1193
    %vm1200 = vweird.f32 %v1194
    %vm1201 = vmor %vm1199, %vm1200
    %v1202 = vsel %vm1201, %v1194, %v1198
    %v1203 = vand.u32 2147483647, %v1193
    %vm1204 = vcmp.eq.f32.partialorder %v1203, 8.507059e+37
    %v1205 = vand.u32 %v1193, 2147483648
    %v1206 = vor.u32 1.1754944e-38, %v1205
    %v1207 = vsel %vm1204, %v1206, %v1202
    %v1208 = vmul.f32 1.0, %v1207
    %v1209 = vtanh.pop %v1189
    %v1211 = vrot.slane %v1078, 6
    %v1213 = vmul.f32 %v1208, %v1211
    %1215 = vrot.lane.b32.xlu0 %v1209, 64
    %v1216 = vpop.permute.xlu0 %1215
    %v1218 = vmul.f32 %v1208, %v1216
    %1220 = vrot.lane.b32.xlu0 %v1218, 32
    %v1221 = vpop.permute.xlu0 %1220
    %v1223 = vadd.f32 %v1213, %v1221
    %v1224 = vtanh.pop %v1223
    %1226 = vrot.lane.b32.xlu0 %v1224, 64
    %v1227 = vpop.permute.xlu0 %1226
    %v1229 = vmul.f32 %v1208, %v1227
    %v1230 = vpack.c.bf16 %v1229, %v1229
    %v1232 = vrot.slane %v1230, 3
    %1233 = vrot.lane.b32.xlu0 %v1232, 32
    %v1234 = vpop.permute.xlu0 %1233
    %v1236 = vsel %vm226, %v1234, 0
    %1238 = vmatpush.bf16.msra.mxu0 0
    %1239 = vmatpush.bf16.msra.mxu0 0
    %1240 = vmatpush.bf16.msra.mxu0 0
    %1241 = vmatpush.bf16.msra.mxu0 0
    %1242 = vmatpush.bf16.msra.mxu0 0
    %1243 = vmatpush.bf16.msra.mxu0 0
    %1244 = vmatpush.bf16.msra.mxu0 %v223
    %1245 = vmatpush.bf16.msra.mxu0 %v222
    %1246 = vmatmul.bf16.gmra.mxu0 %v1236
    %v1247 = vpop.f32.mrf.mxu0
    %v1248 = vadd.f32 %v1183, %v1247
    %v1249 = vpop.f32.mrf.mxu0
    %1250 = vdwg.mxu0
    %v1251 = vadd.f32 %v1248, %v244
    %v1252 = vxor.u32 %v1251, 2147483648
    %v1253 = vmul.f32 %v1252, 1.442695
    %v1254 = vpow.pop %v1253
    %v1255 = vadd.f32 %v1254, 1.0
    %v1256 = vrcp.pop %v1255
    %v1257 = vmul.f32 %v1255, %v1256
    %v1258 = vsub.f32 1.0, %v1257
    %v1259 = vmul.f32 %v1256, %v1258
    %v1260 = vadd.f32 %v1256, %v1259
    %vm1261 = vweird.f32 %v1255
    %vm1262 = vweird.f32 %v1256
    %vm1263 = vmor %vm1261, %vm1262
    %v1264 = vsel %vm1263, %v1256, %v1260
    %v1265 = vand.u32 2147483647, %v1255
    %vm1266 = vcmp.eq.f32.partialorder %v1265, 8.507059e+37
    %v1267 = vand.u32 %v1255, 2147483648
    %v1268 = vor.u32 1.1754944e-38, %v1267
    %v1269 = vsel %vm1266, %v1268, %v1264
    %v1270 = vmul.f32 1.0, %v1269
    %v1271 = vtanh.pop %v1251
    %v1272 = vmul.f32 %v1270, %v1137
    %1274 = vrot.lane.b32.xlu0 %v1271, 64
    %v1275 = vpop.permute.xlu0 %1274
    %v1277 = vmul.f32 %v1270, %v1275
    %1279 = vrot.lane.b32.xlu0 %v1277, 32
    %v1280 = vpop.permute.xlu0 %1279
    %v1282 = vadd.f32 %v1272, %v1280
    %v1283 = vtanh.pop %v1282
    %1285 = vrot.lane.b32.xlu0 %v1283, 64
    %v1286 = vpop.permute.xlu0 %1285
    %v1288 = vmul.f32 %v1270, %v1286
    %v1289 = vld [vmem:[%s6] sm:$0x1]
    %v1291 = vperm.slane %v1289, 0
    %1292 = vrot.lane.b32.xlu0 %v1291, 96
    %v1293 = vpop.permute.xlu0 %1292
    %v1295 = vmul.f32 %v1288, %v1293
    %1297 = vrot.lane.b32.xlu0 %v1295, 32
    %v1298 = vpop.permute.xlu0 %1297
    %vm1300 = vcmask 254976
    %v1301 = vsel %vm1300, %v1298, 0.0
    %1302 = vadd.xlane.f32.xlu0 %v1301
    %v1303 = vpop.xlane.xlu0 %1302
    %v1304 = vld [vmem:[#allocation2] sm:$0x1]
    %v1306 = vperm.slane %v1304, 0
    %v1308 = vadd.f32 %v1303, %v1306
    %vm1309 = vcmask 1024
    %1310 = vst.msk [vmem:[%s8] sm:$0x3] %vm1309, %v1308
    // Predicated region
    $region38: #{lstm_module_forward.1} parent=1 // pred_check
      _
    $region39: #{lstm_module_forward.1} parent=1 // pred_check_branch
      %1312 = sbr.rel (0) target = $region41
    $region40: #{lstm_module_forward.1} parent=1 // pred_region
      _
    $region41: #{lstm_module_forward.1} parent=1 // pred_fallthru
      _
    // Predicated region
    $region42: #{lstm_module_forward.1} parent=1 // pred_check
      _
    $region43: #{lstm_module_forward.1} parent=1 // pred_check_branch
      %1314 = sbr.rel (0) target = $region45
    $region44: #{lstm_module_forward.1} parent=1 // pred_region
      _
    $region45: #{lstm_module_forward.1} parent=1 // pred_fallthru
      _
    %1315 = vsyncpa [#allocation4], 1

</llo_original>
